<compile_context>
chip_gen: v7x
topology: tpu7x:2x2x1
jax: 0.10.0
libtpu: 0.0.40
codegen_flags: <defaults>
</compile_context>

<pallas_src>
import math

import numpy as np
import jax
import jax.numpy as jnp
from jax.experimental import pallas as pl
from jax.experimental.pallas import tpu as pltpu

EPS = 1e-10


# ----------------------------------------------------------------------------
# Structure helpers (pure Python, mirrors find_order in the reference)
# ----------------------------------------------------------------------------
def find_order(structure):
    i_root = structure["root"]
    n_nodes = structure["#nodes"]
    n_edges = len(structure["edges"])
    found = [False] * n_nodes
    found[i_root] = True
    change = True
    order = []
    while change:
        change = False
        for i_edge in range(n_edges):
            i_from, i_to, _ = structure["edges"][i_edge]
            if found[i_from] and (not found[i_to]):
                change = True
                found[i_to] = True
                order.append(i_edge)
    if not all(found):
        raise Exception("The order is incomplete.")
    return order


# ----------------------------------------------------------------------------
# Initialisation glue (plain JAX — faithful port of init_skeleton*)
# ----------------------------------------------------------------------------
def init_skeleton_lengths_jax(x_rec, y_rec, z_rec, w_rec, structure, length0_q,
                              use_z_rec=False, epsilon=EPS):
    nl = structure["#lengths"]
    sums = [jnp.zeros((1, 1), jnp.float32) for _ in range(nl)]
    sumw = [jnp.zeros((1, 1), jnp.float32) for _ in range(nl)]
    for i_from, i_to, i_length in structure["edges"]:
        w = w_rec[:, i_to:i_to + 1] * w_rec[:, i_from:i_from + 1]
        d_x = x_rec[:, i_to:i_to + 1] - x_rec[:, i_from:i_from + 1]
        d_y = y_rec[:, i_to:i_to + 1] - y_rec[:, i_from:i_from + 1]
        d_z = (z_rec[:, i_to:i_to + 1] - z_rec[:, i_from:i_from + 1]) if use_z_rec else 0.0
        n = jnp.sqrt(d_x * d_x + d_y * d_y + d_z * d_z)
        sums[i_length] = sums[i_length] + jnp.sum(w * n, axis=0, keepdims=True)
        sumw[i_length] = sumw[i_length] + jnp.sum(w, axis=0, keepdims=True)
    lengths_0 = jnp.concatenate(sums, axis=1)
    lengths_0_sumw = jnp.concatenate(sumw, axis=1)
    lengths_0 = lengths_0 / (lengths_0_sumw + epsilon)
    return length0_q * lengths_0


def init_direction_jax(from_x, from_y, from_z, from_w, to_x, to_y, to_z, to_w,
                       L, use_z_rec, epsilon=EPS):
    d_x = to_x - from_x
    d_y = to_y - from_y
    if use_z_rec:
        d_z = to_z - from_z
    else:
        n = L * (d_x + d_y) / (to_x + to_y - from_x - from_y)
        d_z2 = n * n - (d_x * d_x + d_y * d_y)
        d_z2 = jnp.where(d_z2 < epsilon, epsilon, d_z2)
        d_z = jnp.sqrt(d_z2)
    eps2 = math.sqrt(epsilon)
    bridge = lambda v: v + eps2 * 0.5 * (jnp.sign(v) + 1.0)
    d_x = bridge(d_x)
    d_y = bridge(d_y)
    d_z = bridge(d_z)
    # The reference redefines `bridge` but then re-applies the *first* formula:
    d_x = d_x + eps2 * 0.5 * (jnp.sign(d_x) + 1.0)
    d_y = d_y + eps2 * 0.5 * (jnp.sign(d_y) + 1.0)
    d_z = d_z + eps2 * 0.5 * (jnp.sign(d_z) + 1.0)
    n = jnp.sqrt(d_x * d_x + d_y * d_y + d_z * d_z)
    direction_x_0 = d_x / (n + epsilon)
    direction_y_0 = jax.lax.stop_gradient(d_y / (n + epsilon))  # .detach()
    direction_z_0 = d_z / (n + epsilon)
    direction_w_0 = from_w * to_w
    return direction_x_0, direction_y_0, direction_z_0, direction_w_0


def init_skeleton_jax(x_rec, y_rec, z_rec, w_rec, structure, order, length0_q,
                      use_z_rec=False, epsilon=EPS):
    i_root = structure["root"]
    n_nodes = structure["#nodes"]
    root_x0 = x_rec[:, i_root:i_root + 1]
    root_y0 = y_rec[:, i_root:i_root + 1]
    root_z0 = z_rec[:, i_root:i_root + 1] if use_z_rec else 0.0 * root_x0
    lengths_0 = init_skeleton_lengths_jax(x_rec, y_rec, z_rec, w_rec, structure,
                                          length0_q, use_z_rec, epsilon)
    loglengths_0 = jnp.log(lengths_0 + epsilon)

    dirs_x, dirs_y, dirs_z, dirs_w = [], [], [], []
    pos_x = [None] * n_nodes
    pos_y = [None] * n_nodes
    pos_z = [None] * n_nodes
    pos_x[i_root] = root_x0
    pos_y[i_root] = root_y0
    pos_z[i_root] = root_z0
    for i_edge in order:
        i_from, i_to, i_length = structure["edges"][i_edge]
        from_w = w_rec[:, i_from:i_from + 1]
        to_x = x_rec[:, i_to:i_to + 1]
        to_y = y_rec[:, i_to:i_to + 1]
        to_z = z_rec[:, i_to:i_to + 1] if use_z_rec else 0.0
        to_w = w_rec[:, i_to:i_to + 1]
        L = lengths_0[0, i_length]
        dx0, dy0, dz0, dw0 = init_direction_jax(
            pos_x[i_from], pos_y[i_from], pos_z[i_from], from_w,
            to_x, to_y, to_z, to_w, L, use_z_rec, epsilon)
        dirs_x.append(dx0)
        dirs_y.append(dy0)
        dirs_z.append(dz0)
        dirs_w.append(dw0)
        pos_x[i_to] = pos_x[i_from] + L * dx0
        pos_y[i_to] = pos_y[i_from] + L * dy0
        pos_z[i_to] = pos_z[i_from] + L * dz0
    dirs_x = jnp.concatenate(dirs_x, axis=1)
    dirs_y = jnp.concatenate(dirs_y, axis=1)
    dirs_z = jnp.concatenate(dirs_z, axis=1)
    dirs_w = jnp.concatenate(dirs_w, axis=1)
    return (root_x0, root_y0, root_z0, dirs_x, dirs_y, dirs_z, dirs_w, loglengths_0)


# ----------------------------------------------------------------------------
# Constant per-axis path-indicator matrix: node_pos = root + sum of unit
# displacements along the root->node path.  Padded to NPAD (multiple of 128)
# columns so the output store is lane-dense; padded columns are exactly zero.
# ----------------------------------------------------------------------------
def build_path_matrices(structure, order, n_pad):
    n_nodes = structure["#nodes"]
    n_edges = len(structure["edges"])
    i_root = structure["root"]
    edges = structure["edges"]

    path_edges = [None] * n_nodes
    path_edges[i_root] = []
    for i_edge in order:
        i_from, i_to, _ = edges[i_edge]
        path_edges[i_to] = path_edges[i_from] + [i_edge]

    P = np.zeros((n_edges, n_pad), np.float32)
    for n in range(n_nodes):
        for e in path_edges[n]:
            P[e, n] = 1.0
    root_row = np.zeros((1, n_pad), np.float32)
    root_row[0, :n_nodes] = 1.0
    return jnp.asarray(P), jnp.asarray(root_row)


def pick_row_tile(T, target=256):
    if T <= target:
        return T
    for tm in range(target, 7, -1):
        if T % tm == 0 and tm % 8 == 0:
            return tm
    # TODO(synk): for T with no multiple-of-8 divisor <= target, fall back to a
    #             single full block; padding T in the wrapper would enable tiling.
    return T


# ----------------------------------------------------------------------------
# Pallas kernel: banded temporal mix (VPU FMA over halo-padded rows) +
# rsqrt normalisation (EUP) + per-axis path matmul (MXU) + per-tile e_reg.
# ----------------------------------------------------------------------------
def make_skeleton_kernel(TM, n_shifts, n_edges, epsilon=EPS):
    E = n_edges

    def kernel(w_ref, px_ref, py_ref, pz_ref, len_ref, path_ref, rootrow_ref,
               x_out, y_out, z_out, ereg_out):
        row0 = pl.program_id(0) * TM

        # Banded mix: mixed[j] = sum_s w[s] * pre_pad[row0 + j + s]
        # (boundary clamping is baked into the halo-padded input rows).
        # TODO(synk): mix_shifts is not defined in the reference; implemented as
        #             a weighted sum over time-shifted copies with clamped ends.
        def mix(pref):
            acc = w_ref[0, 0] * pref[pl.ds(row0, TM), :]
            for s in range(1, n_shifts):
                acc = acc + w_ref[0, s] * pref[pl.ds(row0 + s, TM), :]
            return acc                                            # (TM, 1+E)

        mx = mix(px_ref)   # columns: [root_x | dir_x(E)]
        my = mix(py_ref)
        mz = mix(pz_ref)

        rx, dx = mx[:, 0:1], mx[:, 1:]
        ry, dy = my[:, 0:1], my[:, 1:]
        rz, dz = mz[:, 0:1], mz[:, 1:]

        sumsq = dx * dx + dy * dy + dz * dz                       # (TM, E)
        inv_norm = jax.lax.rsqrt(sumsq + epsilon * epsilon)       # EUP slot
        scale = len_ref[...] * inv_norm                           # (1,E)->(TM,E)

        P = path_ref[...]                                         # (E, NPAD)
        root_row = rootrow_ref[...]                               # (1, NPAD)

        def emit(root_col, units, out_ref):
            nodes = root_col * root_row + jnp.dot(
                units, P, preferred_element_type=jnp.float32)     # (TM, NPAD)
            out_ref[...] = nodes                                  # lane-dense store
            d = nodes[1:, :] - nodes[:-1, :]
            return jnp.sum(d * d)

        # TODO(synk): trajectory_length is not defined in the reference; with
        #             do_sqrt=False it is the sum of squared frame-to-frame
        #             displacements over all nodes.
        traj = emit(rx, dx * scale, x_out)
        traj = traj + emit(ry, dy * scale, y_out)
        traj = traj + emit(rz, dz * scale, z_out)
        ereg_out[0, 0] = traj                                     # per-tile partial

    return kernel


def skeleton_pallas(w_mix_row, prex_pad, prey_pad, prez_pad, lengths_per_edge,
                    path_pad, root_row, T, TM, n_pad, epsilon=EPS):
    n_shifts = w_mix_row.shape[1]
    E = lengths_per_edge.shape[1]
    n_tiles = T // TM
    halo_rows = prex_pad.shape[0]

    kernel = make_skeleton_kernel(TM, n_shifts, E, epsilon)
    full2 = lambda shape: pl.BlockSpec(shape, lambda i: (0, 0))   # resident input
    out_xyz = pl.BlockSpec((TM, n_pad), lambda i: (i, 0))

    # TODO(synk): for very large T the halo-padded pre arrays should be streamed
    #             per tile (with a +/-delta halo) instead of kept VMEM-resident.
    return pl.pallas_call(
        kernel,
        grid=(n_tiles,),
        out_shape=(
            jax.ShapeDtypeStruct((T, n_pad), jnp.float32),
            jax.ShapeDtypeStruct((T, n_pad), jnp.float32),
            jax.ShapeDtypeStruct((T, n_pad), jnp.float32),
            jax.ShapeDtypeStruct((n_tiles, 1), jnp.float32),
        ),
        in_specs=[
            pl.BlockSpec(memory_space=pltpu.MemorySpace.SMEM),    # w_mix (1, n_shifts)
            full2((halo_rows, 1 + E)),                            # pre_x (resident)
            full2((halo_rows, 1 + E)),                            # pre_y
            full2((halo_rows, 1 + E)),                            # pre_z
            full2((1, E)),                                        # lengths per edge
            full2((E, n_pad)),                                    # path matrix
            full2((1, n_pad)),                                    # root-broadcast row
        ],
        out_specs=(
            out_xyz, out_xyz, out_xyz,
            pl.BlockSpec((1, 1), lambda i: (i, 0),
                         memory_space=pltpu.MemorySpace.SMEM),    # e_reg partials
        ),
        compiler_params=pltpu.CompilerParams(
            dimension_semantics=("parallel",),
            vmem_limit_bytes=32 * 1024 * 1024),
    )(w_mix_row, prex_pad, prey_pad, prez_pad, lengths_per_edge, path_pad, root_row)


# ----------------------------------------------------------------------------
# Forward pass (glue + kernel) and a pure-JAX serial reference for validation.
# ----------------------------------------------------------------------------
def prepare_forward_quantities(params, data, structure, order, epsilon=EPS):
    x_rec, y_rec, z_rec = data["x_rec"], data["y_rec"], data["z_rec"]
    w_rec, use_z_rec = data["w_rec"], data["use_z_rec"]

    w_mix = jax.nn.softmax(params["w_mix"], axis=1)               # (1, n_shifts)
    length0_q = jnp.exp(params["loglength0_q"])
    qz = jnp.exp(params["logqz"])
    z_rec = qz * z_rec

    (rpx0, rpy0, rpz0, dx0, dy0, dz0, _dw0, logL0) = init_skeleton_jax(
        x_rec, y_rec, z_rec, w_rec, structure, order, length0_q, use_z_rec, epsilon)

    q_param = 0.1
    root_x = q_param * params["root_positions_x"] + rpx0
    root_y = q_param * params["root_positions_y"] + rpy0
    root_z = q_param * params["root_positions_z"] + rpz0
    loglengths = q_param * params["loglengths"] + logL0
    lengths = jnp.exp(loglengths)                                 # (1, #lengths)
    dir_x = params["directions_x"] + dx0
    dir_y = params["directions_y"] + dy0
    dir_z = params["directions_z"] + dz0
    return w_mix, root_x, root_y, root_z, dir_x, dir_y, dir_z, lengths


def model_forward(params, data, structure, order, shifts_mix, T, epsilon=EPS):
    n_nodes = structure["#nodes"]
    n_edges = len(structure["edges"])
    delta = (len(shifts_mix) - 1) // 2
    assert list(shifts_mix) == list(range(-delta, delta + 1))

    (w_mix, root_x, root_y, root_z, dir_x, dir_y, dir_z, lengths) = \
        prepare_forward_quantities(params, data, structure, order, epsilon)

    # Per-axis [root | dirs] layout, halo-padded with clamped boundary rows so
    # the in-kernel banded mix needs no boundary masking.
    idx = jnp.clip(jnp.arange(T + 2 * delta) - delta, 0, T - 1)

    def pad_axis(root, dirs):
        pre = jnp.concatenate([root, dirs], axis=1).astype(jnp.float32)
        return pre[idx, :]

    prex = pad_axis(root_x, dir_x)
    prey = pad_axis(root_y, dir_y)
    prez = pad_axis(root_z, dir_z)

    edge_len_idx = np.array([e[2] for e in structure["edges"]], np.int32)
    lengths_per_edge = lengths[:, edge_len_idx].astype(jnp.float32)    # (1, E)

    n_pad = ((n_nodes + 127) // 128) * 128
    path_pad, root_row = build_path_matrices(structure, order, n_pad)

    TM = pick_row_tile(T)
    n_tiles = T // TM

    x_pad, y_pad, z_pad, ereg_parts = skeleton_pallas(
        w_mix.astype(jnp.float32), prex, prey, prez, lengths_per_edge,
        path_pad, root_row, T, TM, n_pad, epsilon)

    x = x_pad[:, :n_nodes]
    y = y_pad[:, :n_nodes]
    z = z_pad[:, :n_nodes]

    traj = jnp.sum(ereg_parts)
    if n_tiles > 1:  # cross-tile boundary frame diffs (handled in the wrapper)
        b = np.arange(1, n_tiles) * TM
        bx = x[b] - x[b - 1]
        by = y[b] - y[b - 1]
        bz = z[b] - z[b - 1]
        traj = traj + jnp.sum(bx * bx + by * by + bz * bz)
    e_reg = traj / float(T * n_nodes)
    return x, y, z, e_reg


def model_forward_ref(params, data, structure, order, shifts_mix, T, epsilon=EPS):
    n_nodes = structure["#nodes"]
    (w_mix, root_x, root_y, root_z, dir_x, dir_y, dir_z, lengths) = \
        prepare_forward_quantities(params, data, structure, order, epsilon)
    w_vec = w_mix.reshape(-1)

    def mix(arr):
        t = jnp.arange(T)
        out = jnp.zeros_like(arr)
        for s_idx, sh in enumerate(shifts_mix):
            src = jnp.clip(t + sh, 0, T - 1)
            out = out + w_vec[s_idx] * arr[src, :]
        return out

    root_x, root_y, root_z = mix(root_x), mix(root_y), mix(root_z)
    dir_x, dir_y, dir_z = mix(dir_x), mix(dir_y), mix(dir_z)

    xs = [None] * n_nodes
    ys = [None] * n_nodes
    zs = [None] * n_nodes
    i_root = structure["root"]
    xs[i_root], ys[i_root], zs[i_root] = root_x, root_y, root_z
    for i_edge in order:
        i_from, i_to, i_length = structure["edges"][i_edge]
        L = lengths[:, i_length:i_length + 1]
        dx = dir_x[:, i_edge:i_edge + 1]
        dy = dir_y[:, i_edge:i_edge + 1]
        dz = dir_z[:, i_edge:i_edge + 1]
        norm = jnp.sqrt(dx * dx + dy * dy + dz * dz) + epsilon
        xs[i_to] = xs[i_from] + dx * L / norm
        ys[i_to] = ys[i_from] + dy * L / norm
        zs[i_to] = zs[i_from] + dz * L / norm
    x = jnp.concatenate(xs, axis=1)
    y = jnp.concatenate(ys, axis=1)
    z = jnp.concatenate(zs, axis=1)
    traj = jnp.sum((x[1:] - x[:-1]) ** 2 + (y[1:] - y[:-1]) ** 2 + (z[1:] - z[:-1]) ** 2)
    return x, y, z, traj / float(T * n_nodes)


# ----------------------------------------------------------------------------
if __name__ == "__main__":
    # Small synthetic skeleton: 5 nodes, 4 edges, 4 distinct lengths.
    structure = {
        "root": 0,
        "#nodes": 5,
        "#lengths": 4,
        "edges": [(0, 1, 0), (1, 2, 1), (0, 3, 2), (3, 4, 3)],
    }
    T = 16
    order = find_order(structure)
    n_nodes = structure["#nodes"]
    n_edges = len(structure["edges"])
    n_lengths = structure["#lengths"]
    shifts_delta = 10
    shifts_mix = list(range(-shifts_delta, shifts_delta + 1))

    key = jax.random.PRNGKey(0)
    keys = jax.random.split(key, 16)
    data_for_init = {
        "x_rec": jax.random.normal(keys[0], (T, n_nodes), jnp.float32),
        "y_rec": jax.random.normal(keys[1], (T, n_nodes), jnp.float32),
        "z_rec": jax.random.normal(keys[2], (T, n_nodes), jnp.float32),
        "w_rec": jax.random.uniform(keys[3], (T, n_nodes), jnp.float32, 0.5, 1.0),
        "use_z_rec": True,
    }
    # TODO(synk): ParametersMatrix is not defined in the reference; parameters
    #             are deterministic small random matrices of the implied shapes.
    params = {
        "loglength0_q": 0.1 * jax.random.normal(keys[4], (1, 1), jnp.float32),
        "logqz": 0.1 * jax.random.normal(keys[5], (1, 1), jnp.float32),
        "loglengths": 0.1 * jax.random.normal(keys[6], (1, n_lengths), jnp.float32),
        "root_positions_x": 0.1 * jax.random.normal(keys[7], (T, 1), jnp.float32),
        "root_positions_y": 0.1 * jax.random.normal(keys[8], (T, 1), jnp.float32),
        "root_positions_z": 0.1 * jax.random.normal(keys[9], (T, 1), jnp.float32),
        "directions_x": 0.1 * jax.random.normal(keys[10], (T, n_edges), jnp.float32),
        "directions_y": 0.1 * jax.random.normal(keys[11], (T, n_edges), jnp.float32),
        "directions_z": 0.1 * jax.random.normal(keys[12], (T, n_edges), jnp.float32),
        "w_mix": 0.1 * jax.random.normal(keys[13], (1, len(shifts_mix)), jnp.float32),
    }

    x, y, z, e_reg = model_forward(params, data_for_init, structure, order, shifts_mix, T)
    jax.block_until_ready((x, y, z, e_reg))

    xr, yr, zr, er = model_forward_ref(params, data_for_init, structure, order, shifts_mix, T)
    np.testing.assert_allclose(np.asarray(x), np.asarray(xr), rtol=1e-3, atol=1e-3)
    np.testing.assert_allclose(np.asarray(y), np.asarray(yr), rtol=1e-3, atol=1e-3)
    np.testing.assert_allclose(np.asarray(z), np.asarray(zr), rtol=1e-3, atol=1e-3)
    np.testing.assert_allclose(np.asarray(e_reg), np.asarray(er), rtol=1e-3, atol=1e-3)
    assert np.all(np.isfinite(np.asarray(x)))

    print("KERNEL_OK")
</pallas_src>

<mosaic_0001>
module attributes {stable_mosaic.version = 11 : i64} {
  func.func @kernel(%arg0: i32, %arg1: memref<1x21xf32, #tpu.memory_space<smem>>, %arg2: memref<36x5xf32, #tpu.memory_space<vmem>>, %arg3: memref<36x5xf32, #tpu.memory_space<vmem>>, %arg4: memref<36x5xf32, #tpu.memory_space<vmem>>, %arg5: memref<1x4xf32, #tpu.memory_space<vmem>>, %arg6: memref<4x128xf32, #tpu.memory_space<vmem>>, %arg7: memref<1x128xf32, #tpu.memory_space<vmem>>, %arg8: memref<16x128xf32, #tpu.memory_space<vmem>>, %arg9: memref<16x128xf32, #tpu.memory_space<vmem>>, %arg10: memref<16x128xf32, #tpu.memory_space<vmem>>, %arg11: memref<1x1xf32, #tpu.memory_space<smem>>) attributes {dimension_semantics = [#tpu.dimension_semantics<parallel>], iteration_bounds = array<i64: 1>, scalar_prefetch = 0 : i64, scratch_operands = 0 : i64, tpu.core_type = #tpu.core_type<tc>, window_params = [{transform_indices = @transform_0, window_bounds = array<i64: 1, 21>}, {pipeline_mode = #tpu.pipeline_mode<synchronous>, transform_indices = @transform_1, window_bounds = array<i64: 36, 5>}, {pipeline_mode = #tpu.pipeline_mode<synchronous>, transform_indices = @transform_2, window_bounds = array<i64: 36, 5>}, {pipeline_mode = #tpu.pipeline_mode<synchronous>, transform_indices = @transform_3, window_bounds = array<i64: 36, 5>}, {pipeline_mode = #tpu.pipeline_mode<synchronous>, transform_indices = @transform_4, window_bounds = array<i64: 1, 4>}, {pipeline_mode = #tpu.pipeline_mode<synchronous>, transform_indices = @transform_5, window_bounds = array<i64: 4, 128>}, {pipeline_mode = #tpu.pipeline_mode<synchronous>, transform_indices = @transform_6, window_bounds = array<i64: 1, 128>}, {transform_indices = @transform_7, window_bounds = array<i64: 16, 128>}, {transform_indices = @transform_8, window_bounds = array<i64: 16, 128>}, {transform_indices = @transform_9, window_bounds = array<i64: 16, 128>}, {transform_indices = @transform_10, window_bounds = array<i64: 1, 1>}]} {
    %c16_i32 = arith.constant 16 : i32
    %0 = arith.muli %arg0, %c16_i32 : i32
    %c0 = arith.constant 0 : index
    %c0_0 = arith.constant 0 : index
    %1 = memref.load %arg1[%c0, %c0_0] : memref<1x21xf32, #tpu.memory_space<smem>>
    %2 = arith.index_cast %0 : i32 to index
    %c0_1 = arith.constant 0 : index
    %3 = vector.load %arg2[%2, %c0_1] : memref<36x5xf32, #tpu.memory_space<vmem>>, vector<16x5xf32>
    %4 = vector.broadcast %1 : f32 to vector<16x5xf32>
    %5 = arith.mulf %4, %3 : vector<16x5xf32>
    %c0_2 = arith.constant 0 : index
    %c1 = arith.constant 1 : index
    %6 = memref.load %arg1[%c0_2, %c1] : memref<1x21xf32, #tpu.memory_space<smem>>
    %c1_i32 = arith.constant 1 : i32
    %7 = arith.addi %0, %c1_i32 : i32
    %8 = arith.index_cast %7 : i32 to index
    %c0_3 = arith.constant 0 : index
    %9 = vector.load %arg2[%8, %c0_3] : memref<36x5xf32, #tpu.memory_space<vmem>>, vector<16x5xf32>
    %10 = vector.broadcast %6 : f32 to vector<16x5xf32>
    %11 = arith.mulf %10, %9 : vector<16x5xf32>
    %12 = arith.addf %5, %11 : vector<16x5xf32>
    %c0_4 = arith.constant 0 : index
    %c2 = arith.constant 2 : index
    %13 = memref.load %arg1[%c0_4, %c2] : memref<1x21xf32, #tpu.memory_space<smem>>
    %c2_i32 = arith.constant 2 : i32
    %14 = arith.addi %0, %c2_i32 : i32
    %15 = arith.index_cast %14 : i32 to index
    %c0_5 = arith.constant 0 : index
    %16 = vector.load %arg2[%15, %c0_5] : memref<36x5xf32, #tpu.memory_space<vmem>>, vector<16x5xf32>
    %17 = vector.broadcast %13 : f32 to vector<16x5xf32>
    %18 = arith.mulf %17, %16 : vector<16x5xf32>
    %19 = arith.addf %12, %18 : vector<16x5xf32>
    %c0_6 = arith.constant 0 : index
    %c3 = arith.constant 3 : index
    %20 = memref.load %arg1[%c0_6, %c3] : memref<1x21xf32, #tpu.memory_space<smem>>
    %c3_i32 = arith.constant 3 : i32
    %21 = arith.addi %0, %c3_i32 : i32
    %22 = arith.index_cast %21 : i32 to index
    %c0_7 = arith.constant 0 : index
    %23 = vector.load %arg2[%22, %c0_7] : memref<36x5xf32, #tpu.memory_space<vmem>>, vector<16x5xf32>
    %24 = vector.broadcast %20 : f32 to vector<16x5xf32>
    %25 = arith.mulf %24, %23 : vector<16x5xf32>
    %26 = arith.addf %19, %25 : vector<16x5xf32>
    %c0_8 = arith.constant 0 : index
    %c4 = arith.constant 4 : index
    %27 = memref.load %arg1[%c0_8, %c4] : memref<1x21xf32, #tpu.memory_space<smem>>
    %c4_i32 = arith.constant 4 : i32
    %28 = arith.addi %0, %c4_i32 : i32
    %29 = arith.index_cast %28 : i32 to index
    %c0_9 = arith.constant 0 : index
    %30 = vector.load %arg2[%29, %c0_9] : memref<36x5xf32, #tpu.memory_space<vmem>>, vector<16x5xf32>
    %31 = vector.broadcast %27 : f32 to vector<16x5xf32>
    %32 = arith.mulf %31, %30 : vector<16x5xf32>
    %33 = arith.addf %26, %32 : vector<16x5xf32>
    %c0_10 = arith.constant 0 : index
    %c5 = arith.constant 5 : index
    %34 = memref.load %arg1[%c0_10, %c5] : memref<1x21xf32, #tpu.memory_space<smem>>
    %c5_i32 = arith.constant 5 : i32
    %35 = arith.addi %0, %c5_i32 : i32
    %36 = arith.index_cast %35 : i32 to index
    %c0_11 = arith.constant 0 : index
    %37 = vector.load %arg2[%36, %c0_11] : memref<36x5xf32, #tpu.memory_space<vmem>>, vector<16x5xf32>
    %38 = vector.broadcast %34 : f32 to vector<16x5xf32>
    %39 = arith.mulf %38, %37 : vector<16x5xf32>
    %40 = arith.addf %33, %39 : vector<16x5xf32>
    %c0_12 = arith.constant 0 : index
    %c6 = arith.constant 6 : index
    %41 = memref.load %arg1[%c0_12, %c6] : memref<1x21xf32, #tpu.memory_space<smem>>
    %c6_i32 = arith.constant 6 : i32
    %42 = arith.addi %0, %c6_i32 : i32
    %43 = arith.index_cast %42 : i32 to index
    %c0_13 = arith.constant 0 : index
    %44 = vector.load %arg2[%43, %c0_13] : memref<36x5xf32, #tpu.memory_space<vmem>>, vector<16x5xf32>
    %45 = vector.broadcast %41 : f32 to vector<16x5xf32>
    %46 = arith.mulf %45, %44 : vector<16x5xf32>
    %47 = arith.addf %40, %46 : vector<16x5xf32>
    %c0_14 = arith.constant 0 : index
    %c7 = arith.constant 7 : index
    %48 = memref.load %arg1[%c0_14, %c7] : memref<1x21xf32, #tpu.memory_space<smem>>
    %c7_i32 = arith.constant 7 : i32
    %49 = arith.addi %0, %c7_i32 : i32
    %50 = arith.index_cast %49 : i32 to index
    %c0_15 = arith.constant 0 : index
    %51 = vector.load %arg2[%50, %c0_15] : memref<36x5xf32, #tpu.memory_space<vmem>>, vector<16x5xf32>
    %52 = vector.broadcast %48 : f32 to vector<16x5xf32>
    %53 = arith.mulf %52, %51 : vector<16x5xf32>
    %54 = arith.addf %47, %53 : vector<16x5xf32>
    %c0_16 = arith.constant 0 : index
    %c8 = arith.constant 8 : index
    %55 = memref.load %arg1[%c0_16, %c8] : memref<1x21xf32, #tpu.memory_space<smem>>
    %c8_i32 = arith.constant 8 : i32
    %56 = arith.addi %0, %c8_i32 : i32
    %57 = arith.index_cast %56 : i32 to index
    %c0_17 = arith.constant 0 : index
    %58 = vector.load %arg2[%57, %c0_17] : memref<36x5xf32, #tpu.memory_space<vmem>>, vector<16x5xf32>
    %59 = vector.broadcast %55 : f32 to vector<16x5xf32>
    %60 = arith.mulf %59, %58 : vector<16x5xf32>
    %61 = arith.addf %54, %60 : vector<16x5xf32>
    %c0_18 = arith.constant 0 : index
    %c9 = arith.constant 9 : index
    %62 = memref.load %arg1[%c0_18, %c9] : memref<1x21xf32, #tpu.memory_space<smem>>
    %c9_i32 = arith.constant 9 : i32
    %63 = arith.addi %0, %c9_i32 : i32
    %64 = arith.index_cast %63 : i32 to index
    %c0_19 = arith.constant 0 : index
    %65 = vector.load %arg2[%64, %c0_19] : memref<36x5xf32, #tpu.memory_space<vmem>>, vector<16x5xf32>
    %66 = vector.broadcast %62 : f32 to vector<16x5xf32>
    %67 = arith.mulf %66, %65 : vector<16x5xf32>
    %68 = arith.addf %61, %67 : vector<16x5xf32>
    %c0_20 = arith.constant 0 : index
    %c10 = arith.constant 10 : index
    %69 = memref.load %arg1[%c0_20, %c10] : memref<1x21xf32, #tpu.memory_space<smem>>
    %c10_i32 = arith.constant 10 : i32
    %70 = arith.addi %0, %c10_i32 : i32
    %71 = arith.index_cast %70 : i32 to index
    %c0_21 = arith.constant 0 : index
    %72 = vector.load %arg2[%71, %c0_21] : memref<36x5xf32, #tpu.memory_space<vmem>>, vector<16x5xf32>
    %73 = vector.broadcast %69 : f32 to vector<16x5xf32>
    %74 = arith.mulf %73, %72 : vector<16x5xf32>
    %75 = arith.addf %68, %74 : vector<16x5xf32>
    %c0_22 = arith.constant 0 : index
    %c11 = arith.constant 11 : index
    %76 = memref.load %arg1[%c0_22, %c11] : memref<1x21xf32, #tpu.memory_space<smem>>
    %c11_i32 = arith.constant 11 : i32
    %77 = arith.addi %0, %c11_i32 : i32
    %78 = arith.index_cast %77 : i32 to index
    %c0_23 = arith.constant 0 : index
    %79 = vector.load %arg2[%78, %c0_23] : memref<36x5xf32, #tpu.memory_space<vmem>>, vector<16x5xf32>
    %80 = vector.broadcast %76 : f32 to vector<16x5xf32>
    %81 = arith.mulf %80, %79 : vector<16x5xf32>
    %82 = arith.addf %75, %81 : vector<16x5xf32>
    %c0_24 = arith.constant 0 : index
    %c12 = arith.constant 12 : index
    %83 = memref.load %arg1[%c0_24, %c12] : memref<1x21xf32, #tpu.memory_space<smem>>
    %c12_i32 = arith.constant 12 : i32
    %84 = arith.addi %0, %c12_i32 : i32
    %85 = arith.index_cast %84 : i32 to index
    %c0_25 = arith.constant 0 : index
    %86 = vector.load %arg2[%85, %c0_25] : memref<36x5xf32, #tpu.memory_space<vmem>>, vector<16x5xf32>
    %87 = vector.broadcast %83 : f32 to vector<16x5xf32>
    %88 = arith.mulf %87, %86 : vector<16x5xf32>
    %89 = arith.addf %82, %88 : vector<16x5xf32>
    %c0_26 = arith.constant 0 : index
    %c13 = arith.constant 13 : index
    %90 = memref.load %arg1[%c0_26, %c13] : memref<1x21xf32, #tpu.memory_space<smem>>
    %c13_i32 = arith.constant 13 : i32
    %91 = arith.addi %0, %c13_i32 : i32
    %92 = arith.index_cast %91 : i32 to index
    %c0_27 = arith.constant 0 : index
    %93 = vector.load %arg2[%92, %c0_27] : memref<36x5xf32, #tpu.memory_space<vmem>>, vector<16x5xf32>
    %94 = vector.broadcast %90 : f32 to vector<16x5xf32>
    %95 = arith.mulf %94, %93 : vector<16x5xf32>
    %96 = arith.addf %89, %95 : vector<16x5xf32>
    %c0_28 = arith.constant 0 : index
    %c14 = arith.constant 14 : index
    %97 = memref.load %arg1[%c0_28, %c14] : memref<1x21xf32, #tpu.memory_space<smem>>
    %c14_i32 = arith.constant 14 : i32
    %98 = arith.addi %0, %c14_i32 : i32
    %99 = arith.index_cast %98 : i32 to index
    %c0_29 = arith.constant 0 : index
    %100 = vector.load %arg2[%99, %c0_29] : memref<36x5xf32, #tpu.memory_space<vmem>>, vector<16x5xf32>
    %101 = vector.broadcast %97 : f32 to vector<16x5xf32>
    %102 = arith.mulf %101, %100 : vector<16x5xf32>
    %103 = arith.addf %96, %102 : vector<16x5xf32>
    %c0_30 = arith.constant 0 : index
    %c15 = arith.constant 15 : index
    %104 = memref.load %arg1[%c0_30, %c15] : memref<1x21xf32, #tpu.memory_space<smem>>
    %c15_i32 = arith.constant 15 : i32
    %105 = arith.addi %0, %c15_i32 : i32
    %106 = arith.index_cast %105 : i32 to index
    %c0_31 = arith.constant 0 : index
    %107 = vector.load %arg2[%106, %c0_31] : memref<36x5xf32, #tpu.memory_space<vmem>>, vector<16x5xf32>
    %108 = vector.broadcast %104 : f32 to vector<16x5xf32>
    %109 = arith.mulf %108, %107 : vector<16x5xf32>
    %110 = arith.addf %103, %109 : vector<16x5xf32>
    %c0_32 = arith.constant 0 : index
    %c16 = arith.constant 16 : index
    %111 = memref.load %arg1[%c0_32, %c16] : memref<1x21xf32, #tpu.memory_space<smem>>
    %c16_i32_33 = arith.constant 16 : i32
    %112 = arith.addi %0, %c16_i32_33 : i32
    %113 = arith.index_cast %112 : i32 to index
    %c0_34 = arith.constant 0 : index
    %114 = vector.load %arg2[%113, %c0_34] : memref<36x5xf32, #tpu.memory_space<vmem>>, vector<16x5xf32>
    %115 = vector.broadcast %111 : f32 to vector<16x5xf32>
    %116 = arith.mulf %115, %114 : vector<16x5xf32>
    %117 = arith.addf %110, %116 : vector<16x5xf32>
    %c0_35 = arith.constant 0 : index
    %c17 = arith.constant 17 : index
    %118 = memref.load %arg1[%c0_35, %c17] : memref<1x21xf32, #tpu.memory_space<smem>>
    %c17_i32 = arith.constant 17 : i32
    %119 = arith.addi %0, %c17_i32 : i32
    %120 = arith.index_cast %119 : i32 to index
    %c0_36 = arith.constant 0 : index
    %121 = vector.load %arg2[%120, %c0_36] : memref<36x5xf32, #tpu.memory_space<vmem>>, vector<16x5xf32>
    %122 = vector.broadcast %118 : f32 to vector<16x5xf32>
    %123 = arith.mulf %122, %121 : vector<16x5xf32>
    %124 = arith.addf %117, %123 : vector<16x5xf32>
    %c0_37 = arith.constant 0 : index
    %c18 = arith.constant 18 : index
    %125 = memref.load %arg1[%c0_37, %c18] : memref<1x21xf32, #tpu.memory_space<smem>>
    %c18_i32 = arith.constant 18 : i32
    %126 = arith.addi %0, %c18_i32 : i32
    %127 = arith.index_cast %126 : i32 to index
    %c0_38 = arith.constant 0 : index
    %128 = vector.load %arg2[%127, %c0_38] : memref<36x5xf32, #tpu.memory_space<vmem>>, vector<16x5xf32>
    %129 = vector.broadcast %125 : f32 to vector<16x5xf32>
    %130 = arith.mulf %129, %128 : vector<16x5xf32>
    %131 = arith.addf %124, %130 : vector<16x5xf32>
    %c0_39 = arith.constant 0 : index
    %c19 = arith.constant 19 : index
    %132 = memref.load %arg1[%c0_39, %c19] : memref<1x21xf32, #tpu.memory_space<smem>>
    %c19_i32 = arith.constant 19 : i32
    %133 = arith.addi %0, %c19_i32 : i32
    %134 = arith.index_cast %133 : i32 to index
    %c0_40 = arith.constant 0 : index
    %135 = vector.load %arg2[%134, %c0_40] : memref<36x5xf32, #tpu.memory_space<vmem>>, vector<16x5xf32>
    %136 = vector.broadcast %132 : f32 to vector<16x5xf32>
    %137 = arith.mulf %136, %135 : vector<16x5xf32>
    %138 = arith.addf %131, %137 : vector<16x5xf32>
    %c0_41 = arith.constant 0 : index
    %c20 = arith.constant 20 : index
    %139 = memref.load %arg1[%c0_41, %c20] : memref<1x21xf32, #tpu.memory_space<smem>>
    %c20_i32 = arith.constant 20 : i32
    %140 = arith.addi %0, %c20_i32 : i32
    %141 = arith.index_cast %140 : i32 to index
    %c0_42 = arith.constant 0 : index
    %142 = vector.load %arg2[%141, %c0_42] : memref<36x5xf32, #tpu.memory_space<vmem>>, vector<16x5xf32>
    %143 = vector.broadcast %139 : f32 to vector<16x5xf32>
    %144 = arith.mulf %143, %142 : vector<16x5xf32>
    %145 = arith.addf %138, %144 : vector<16x5xf32>
    %c0_43 = arith.constant 0 : index
    %c0_44 = arith.constant 0 : index
    %146 = memref.load %arg1[%c0_43, %c0_44] : memref<1x21xf32, #tpu.memory_space<smem>>
    %147 = arith.index_cast %0 : i32 to index
    %c0_45 = arith.constant 0 : index
    %148 = vector.load %arg3[%147, %c0_45] : memref<36x5xf32, #tpu.memory_space<vmem>>, vector<16x5xf32>
    %149 = vector.broadcast %146 : f32 to vector<16x5xf32>
    %150 = arith.mulf %149, %148 : vector<16x5xf32>
    %c0_46 = arith.constant 0 : index
    %c1_47 = arith.constant 1 : index
    %151 = memref.load %arg1[%c0_46, %c1_47] : memref<1x21xf32, #tpu.memory_space<smem>>
    %c1_i32_48 = arith.constant 1 : i32
    %152 = arith.addi %0, %c1_i32_48 : i32
    %153 = arith.index_cast %152 : i32 to index
    %c0_49 = arith.constant 0 : index
    %154 = vector.load %arg3[%153, %c0_49] : memref<36x5xf32, #tpu.memory_space<vmem>>, vector<16x5xf32>
    %155 = vector.broadcast %151 : f32 to vector<16x5xf32>
    %156 = arith.mulf %155, %154 : vector<16x5xf32>
    %157 = arith.addf %150, %156 : vector<16x5xf32>
    %c0_50 = arith.constant 0 : index
    %c2_51 = arith.constant 2 : index
    %158 = memref.load %arg1[%c0_50, %c2_51] : memref<1x21xf32, #tpu.memory_space<smem>>
    %c2_i32_52 = arith.constant 2 : i32
    %159 = arith.addi %0, %c2_i32_52 : i32
    %160 = arith.index_cast %159 : i32 to index
    %c0_53 = arith.constant 0 : index
    %161 = vector.load %arg3[%160, %c0_53] : memref<36x5xf32, #tpu.memory_space<vmem>>, vector<16x5xf32>
    %162 = vector.broadcast %158 : f32 to vector<16x5xf32>
    %163 = arith.mulf %162, %161 : vector<16x5xf32>
    %164 = arith.addf %157, %163 : vector<16x5xf32>
    %c0_54 = arith.constant 0 : index
    %c3_55 = arith.constant 3 : index
    %165 = memref.load %arg1[%c0_54, %c3_55] : memref<1x21xf32, #tpu.memory_space<smem>>
    %c3_i32_56 = arith.constant 3 : i32
    %166 = arith.addi %0, %c3_i32_56 : i32
    %167 = arith.index_cast %166 : i32 to index
    %c0_57 = arith.constant 0 : index
    %168 = vector.load %arg3[%167, %c0_57] : memref<36x5xf32, #tpu.memory_space<vmem>>, vector<16x5xf32>
    %169 = vector.broadcast %165 : f32 to vector<16x5xf32>
    %170 = arith.mulf %169, %168 : vector<16x5xf32>
    %171 = arith.addf %164, %170 : vector<16x5xf32>
    %c0_58 = arith.constant 0 : index
    %c4_59 = arith.constant 4 : index
    %172 = memref.load %arg1[%c0_58, %c4_59] : memref<1x21xf32, #tpu.memory_space<smem>>
    %c4_i32_60 = arith.constant 4 : i32
    %173 = arith.addi %0, %c4_i32_60 : i32
    %174 = arith.index_cast %173 : i32 to index
    %c0_61 = arith.constant 0 : index
    %175 = vector.load %arg3[%174, %c0_61] : memref<36x5xf32, #tpu.memory_space<vmem>>, vector<16x5xf32>
    %176 = vector.broadcast %172 : f32 to vector<16x5xf32>
    %177 = arith.mulf %176, %175 : vector<16x5xf32>
    %178 = arith.addf %171, %177 : vector<16x5xf32>
    %c0_62 = arith.constant 0 : index
    %c5_63 = arith.constant 5 : index
    %179 = memref.load %arg1[%c0_62, %c5_63] : memref<1x21xf32, #tpu.memory_space<smem>>
    %c5_i32_64 = arith.constant 5 : i32
    %180 = arith.addi %0, %c5_i32_64 : i32
    %181 = arith.index_cast %180 : i32 to index
    %c0_65 = arith.constant 0 : index
    %182 = vector.load %arg3[%181, %c0_65] : memref<36x5xf32, #tpu.memory_space<vmem>>, vector<16x5xf32>
    %183 = vector.broadcast %179 : f32 to vector<16x5xf32>
    %184 = arith.mulf %183, %182 : vector<16x5xf32>
    %185 = arith.addf %178, %184 : vector<16x5xf32>
    %c0_66 = arith.constant 0 : index
    %c6_67 = arith.constant 6 : index
    %186 = memref.load %arg1[%c0_66, %c6_67] : memref<1x21xf32, #tpu.memory_space<smem>>
    %c6_i32_68 = arith.constant 6 : i32
    %187 = arith.addi %0, %c6_i32_68 : i32
    %188 = arith.index_cast %187 : i32 to index
    %c0_69 = arith.constant 0 : index
    %189 = vector.load %arg3[%188, %c0_69] : memref<36x5xf32, #tpu.memory_space<vmem>>, vector<16x5xf32>
    %190 = vector.broadcast %186 : f32 to vector<16x5xf32>
    %191 = arith.mulf %190, %189 : vector<16x5xf32>
    %192 = arith.addf %185, %191 : vector<16x5xf32>
    %c0_70 = arith.constant 0 : index
    %c7_71 = arith.constant 7 : index
    %193 = memref.load %arg1[%c0_70, %c7_71] : memref<1x21xf32, #tpu.memory_space<smem>>
    %c7_i32_72 = arith.constant 7 : i32
    %194 = arith.addi %0, %c7_i32_72 : i32
    %195 = arith.index_cast %194 : i32 to index
    %c0_73 = arith.constant 0 : index
    %196 = vector.load %arg3[%195, %c0_73] : memref<36x5xf32, #tpu.memory_space<vmem>>, vector<16x5xf32>
    %197 = vector.broadcast %193 : f32 to vector<16x5xf32>
    %198 = arith.mulf %197, %196 : vector<16x5xf32>
    %199 = arith.addf %192, %198 : vector<16x5xf32>
    %c0_74 = arith.constant 0 : index
    %c8_75 = arith.constant 8 : index
    %200 = memref.load %arg1[%c0_74, %c8_75] : memref<1x21xf32, #tpu.memory_space<smem>>
    %c8_i32_76 = arith.constant 8 : i32
    %201 = arith.addi %0, %c8_i32_76 : i32
    %202 = arith.index_cast %201 : i32 to index
    %c0_77 = arith.constant 0 : index
    %203 = vector.load %arg3[%202, %c0_77] : memref<36x5xf32, #tpu.memory_space<vmem>>, vector<16x5xf32>
    %204 = vector.broadcast %200 : f32 to vector<16x5xf32>
    %205 = arith.mulf %204, %203 : vector<16x5xf32>
    %206 = arith.addf %199, %205 : vector<16x5xf32>
    %c0_78 = arith.constant 0 : index
    %c9_79 = arith.constant 9 : index
    %207 = memref.load %arg1[%c0_78, %c9_79] : memref<1x21xf32, #tpu.memory_space<smem>>
    %c9_i32_80 = arith.constant 9 : i32
    %208 = arith.addi %0, %c9_i32_80 : i32
    %209 = arith.index_cast %208 : i32 to index
    %c0_81 = arith.constant 0 : index
    %210 = vector.load %arg3[%209, %c0_81] : memref<36x5xf32, #tpu.memory_space<vmem>>, vector<16x5xf32>
    %211 = vector.broadcast %207 : f32 to vector<16x5xf32>
    %212 = arith.mulf %211, %210 : vector<16x5xf32>
    %213 = arith.addf %206, %212 : vector<16x5xf32>
    %c0_82 = arith.constant 0 : index
    %c10_83 = arith.constant 10 : index
    %214 = memref.load %arg1[%c0_82, %c10_83] : memref<1x21xf32, #tpu.memory_space<smem>>
    %c10_i32_84 = arith.constant 10 : i32
    %215 = arith.addi %0, %c10_i32_84 : i32
    %216 = arith.index_cast %215 : i32 to index
    %c0_85 = arith.constant 0 : index
    %217 = vector.load %arg3[%216, %c0_85] : memref<36x5xf32, #tpu.memory_space<vmem>>, vector<16x5xf32>
    %218 = vector.broadcast %214 : f32 to vector<16x5xf32>
    %219 = arith.mulf %218, %217 : vector<16x5xf32>
    %220 = arith.addf %213, %219 : vector<16x5xf32>
    %c0_86 = arith.constant 0 : index
    %c11_87 = arith.constant 11 : index
    %221 = memref.load %arg1[%c0_86, %c11_87] : memref<1x21xf32, #tpu.memory_space<smem>>
    %c11_i32_88 = arith.constant 11 : i32
    %222 = arith.addi %0, %c11_i32_88 : i32
    %223 = arith.index_cast %222 : i32 to index
    %c0_89 = arith.constant 0 : index
    %224 = vector.load %arg3[%223, %c0_89] : memref<36x5xf32, #tpu.memory_space<vmem>>, vector<16x5xf32>
    %225 = vector.broadcast %221 : f32 to vector<16x5xf32>
    %226 = arith.mulf %225, %224 : vector<16x5xf32>
    %227 = arith.addf %220, %226 : vector<16x5xf32>
    %c0_90 = arith.constant 0 : index
    %c12_91 = arith.constant 12 : index
    %228 = memref.load %arg1[%c0_90, %c12_91] : memref<1x21xf32, #tpu.memory_space<smem>>
    %c12_i32_92 = arith.constant 12 : i32
    %229 = arith.addi %0, %c12_i32_92 : i32
    %230 = arith.index_cast %229 : i32 to index
    %c0_93 = arith.constant 0 : index
    %231 = vector.load %arg3[%230, %c0_93] : memref<36x5xf32, #tpu.memory_space<vmem>>, vector<16x5xf32>
    %232 = vector.broadcast %228 : f32 to vector<16x5xf32>
    %233 = arith.mulf %232, %231 : vector<16x5xf32>
    %234 = arith.addf %227, %233 : vector<16x5xf32>
    %c0_94 = arith.constant 0 : index
    %c13_95 = arith.constant 13 : index
    %235 = memref.load %arg1[%c0_94, %c13_95] : memref<1x21xf32, #tpu.memory_space<smem>>
    %c13_i32_96 = arith.constant 13 : i32
    %236 = arith.addi %0, %c13_i32_96 : i32
    %237 = arith.index_cast %236 : i32 to index
    %c0_97 = arith.constant 0 : index
    %238 = vector.load %arg3[%237, %c0_97] : memref<36x5xf32, #tpu.memory_space<vmem>>, vector<16x5xf32>
    %239 = vector.broadcast %235 : f32 to vector<16x5xf32>
    %240 = arith.mulf %239, %238 : vector<16x5xf32>
    %241 = arith.addf %234, %240 : vector<16x5xf32>
    %c0_98 = arith.constant 0 : index
    %c14_99 = arith.constant 14 : index
    %242 = memref.load %arg1[%c0_98, %c14_99] : memref<1x21xf32, #tpu.memory_space<smem>>
    %c14_i32_100 = arith.constant 14 : i32
    %243 = arith.addi %0, %c14_i32_100 : i32
    %244 = arith.index_cast %243 : i32 to index
    %c0_101 = arith.constant 0 : index
    %245 = vector.load %arg3[%244, %c0_101] : memref<36x5xf32, #tpu.memory_space<vmem>>, vector<16x5xf32>
    %246 = vector.broadcast %242 : f32 to vector<16x5xf32>
    %247 = arith.mulf %246, %245 : vector<16x5xf32>
    %248 = arith.addf %241, %247 : vector<16x5xf32>
    %c0_102 = arith.constant 0 : index
    %c15_103 = arith.constant 15 : index
    %249 = memref.load %arg1[%c0_102, %c15_103] : memref<1x21xf32, #tpu.memory_space<smem>>
    %c15_i32_104 = arith.constant 15 : i32
    %250 = arith.addi %0, %c15_i32_104 : i32
    %251 = arith.index_cast %250 : i32 to index
    %c0_105 = arith.constant 0 : index
    %252 = vector.load %arg3[%251, %c0_105] : memref<36x5xf32, #tpu.memory_space<vmem>>, vector<16x5xf32>
    %253 = vector.broadcast %249 : f32 to vector<16x5xf32>
    %254 = arith.mulf %253, %252 : vector<16x5xf32>
    %255 = arith.addf %248, %254 : vector<16x5xf32>
    %c0_106 = arith.constant 0 : index
    %c16_107 = arith.constant 16 : index
    %256 = memref.load %arg1[%c0_106, %c16_107] : memref<1x21xf32, #tpu.memory_space<smem>>
    %c16_i32_108 = arith.constant 16 : i32
    %257 = arith.addi %0, %c16_i32_108 : i32
    %258 = arith.index_cast %257 : i32 to index
    %c0_109 = arith.constant 0 : index
    %259 = vector.load %arg3[%258, %c0_109] : memref<36x5xf32, #tpu.memory_space<vmem>>, vector<16x5xf32>
    %260 = vector.broadcast %256 : f32 to vector<16x5xf32>
    %261 = arith.mulf %260, %259 : vector<16x5xf32>
    %262 = arith.addf %255, %261 : vector<16x5xf32>
    %c0_110 = arith.constant 0 : index
    %c17_111 = arith.constant 17 : index
    %263 = memref.load %arg1[%c0_110, %c17_111] : memref<1x21xf32, #tpu.memory_space<smem>>
    %c17_i32_112 = arith.constant 17 : i32
    %264 = arith.addi %0, %c17_i32_112 : i32
    %265 = arith.index_cast %264 : i32 to index
    %c0_113 = arith.constant 0 : index
    %266 = vector.load %arg3[%265, %c0_113] : memref<36x5xf32, #tpu.memory_space<vmem>>, vector<16x5xf32>
    %267 = vector.broadcast %263 : f32 to vector<16x5xf32>
    %268 = arith.mulf %267, %266 : vector<16x5xf32>
    %269 = arith.addf %262, %268 : vector<16x5xf32>
    %c0_114 = arith.constant 0 : index
    %c18_115 = arith.constant 18 : index
    %270 = memref.load %arg1[%c0_114, %c18_115] : memref<1x21xf32, #tpu.memory_space<smem>>
    %c18_i32_116 = arith.constant 18 : i32
    %271 = arith.addi %0, %c18_i32_116 : i32
    %272 = arith.index_cast %271 : i32 to index
    %c0_117 = arith.constant 0 : index
    %273 = vector.load %arg3[%272, %c0_117] : memref<36x5xf32, #tpu.memory_space<vmem>>, vector<16x5xf32>
    %274 = vector.broadcast %270 : f32 to vector<16x5xf32>
    %275 = arith.mulf %274, %273 : vector<16x5xf32>
    %276 = arith.addf %269, %275 : vector<16x5xf32>
    %c0_118 = arith.constant 0 : index
    %c19_119 = arith.constant 19 : index
    %277 = memref.load %arg1[%c0_118, %c19_119] : memref<1x21xf32, #tpu.memory_space<smem>>
    %c19_i32_120 = arith.constant 19 : i32
    %278 = arith.addi %0, %c19_i32_120 : i32
    %279 = arith.index_cast %278 : i32 to index
    %c0_121 = arith.constant 0 : index
    %280 = vector.load %arg3[%279, %c0_121] : memref<36x5xf32, #tpu.memory_space<vmem>>, vector<16x5xf32>
    %281 = vector.broadcast %277 : f32 to vector<16x5xf32>
    %282 = arith.mulf %281, %280 : vector<16x5xf32>
    %283 = arith.addf %276, %282 : vector<16x5xf32>
    %c0_122 = arith.constant 0 : index
    %c20_123 = arith.constant 20 : index
    %284 = memref.load %arg1[%c0_122, %c20_123] : memref<1x21xf32, #tpu.memory_space<smem>>
    %c20_i32_124 = arith.constant 20 : i32
    %285 = arith.addi %0, %c20_i32_124 : i32
    %286 = arith.index_cast %285 : i32 to index
    %c0_125 = arith.constant 0 : index
    %287 = vector.load %arg3[%286, %c0_125] : memref<36x5xf32, #tpu.memory_space<vmem>>, vector<16x5xf32>
    %288 = vector.broadcast %284 : f32 to vector<16x5xf32>
    %289 = arith.mulf %288, %287 : vector<16x5xf32>
    %290 = arith.addf %283, %289 : vector<16x5xf32>
    %c0_126 = arith.constant 0 : index
    %c0_127 = arith.constant 0 : index
    %291 = memref.load %arg1[%c0_126, %c0_127] : memref<1x21xf32, #tpu.memory_space<smem>>
    %292 = arith.index_cast %0 : i32 to index
    %c0_128 = arith.constant 0 : index
    %293 = vector.load %arg4[%292, %c0_128] : memref<36x5xf32, #tpu.memory_space<vmem>>, vector<16x5xf32>
    %294 = vector.broadcast %291 : f32 to vector<16x5xf32>
    %295 = arith.mulf %294, %293 : vector<16x5xf32>
    %c0_129 = arith.constant 0 : index
    %c1_130 = arith.constant 1 : index
    %296 = memref.load %arg1[%c0_129, %c1_130] : memref<1x21xf32, #tpu.memory_space<smem>>
    %c1_i32_131 = arith.constant 1 : i32
    %297 = arith.addi %0, %c1_i32_131 : i32
    %298 = arith.index_cast %297 : i32 to index
    %c0_132 = arith.constant 0 : index
    %299 = vector.load %arg4[%298, %c0_132] : memref<36x5xf32, #tpu.memory_space<vmem>>, vector<16x5xf32>
    %300 = vector.broadcast %296 : f32 to vector<16x5xf32>
    %301 = arith.mulf %300, %299 : vector<16x5xf32>
    %302 = arith.addf %295, %301 : vector<16x5xf32>
    %c0_133 = arith.constant 0 : index
    %c2_134 = arith.constant 2 : index
    %303 = memref.load %arg1[%c0_133, %c2_134] : memref<1x21xf32, #tpu.memory_space<smem>>
    %c2_i32_135 = arith.constant 2 : i32
    %304 = arith.addi %0, %c2_i32_135 : i32
    %305 = arith.index_cast %304 : i32 to index
    %c0_136 = arith.constant 0 : index
    %306 = vector.load %arg4[%305, %c0_136] : memref<36x5xf32, #tpu.memory_space<vmem>>, vector<16x5xf32>
    %307 = vector.broadcast %303 : f32 to vector<16x5xf32>
    %308 = arith.mulf %307, %306 : vector<16x5xf32>
    %309 = arith.addf %302, %308 : vector<16x5xf32>
    %c0_137 = arith.constant 0 : index
    %c3_138 = arith.constant 3 : index
    %310 = memref.load %arg1[%c0_137, %c3_138] : memref<1x21xf32, #tpu.memory_space<smem>>
    %c3_i32_139 = arith.constant 3 : i32
    %311 = arith.addi %0, %c3_i32_139 : i32
    %312 = arith.index_cast %311 : i32 to index
    %c0_140 = arith.constant 0 : index
    %313 = vector.load %arg4[%312, %c0_140] : memref<36x5xf32, #tpu.memory_space<vmem>>, vector<16x5xf32>
    %314 = vector.broadcast %310 : f32 to vector<16x5xf32>
    %315 = arith.mulf %314, %313 : vector<16x5xf32>
    %316 = arith.addf %309, %315 : vector<16x5xf32>
    %c0_141 = arith.constant 0 : index
    %c4_142 = arith.constant 4 : index
    %317 = memref.load %arg1[%c0_141, %c4_142] : memref<1x21xf32, #tpu.memory_space<smem>>
    %c4_i32_143 = arith.constant 4 : i32
    %318 = arith.addi %0, %c4_i32_143 : i32
    %319 = arith.index_cast %318 : i32 to index
    %c0_144 = arith.constant 0 : index
    %320 = vector.load %arg4[%319, %c0_144] : memref<36x5xf32, #tpu.memory_space<vmem>>, vector<16x5xf32>
    %321 = vector.broadcast %317 : f32 to vector<16x5xf32>
    %322 = arith.mulf %321, %320 : vector<16x5xf32>
    %323 = arith.addf %316, %322 : vector<16x5xf32>
    %c0_145 = arith.constant 0 : index
    %c5_146 = arith.constant 5 : index
    %324 = memref.load %arg1[%c0_145, %c5_146] : memref<1x21xf32, #tpu.memory_space<smem>>
    %c5_i32_147 = arith.constant 5 : i32
    %325 = arith.addi %0, %c5_i32_147 : i32
    %326 = arith.index_cast %325 : i32 to index
    %c0_148 = arith.constant 0 : index
    %327 = vector.load %arg4[%326, %c0_148] : memref<36x5xf32, #tpu.memory_space<vmem>>, vector<16x5xf32>
    %328 = vector.broadcast %324 : f32 to vector<16x5xf32>
    %329 = arith.mulf %328, %327 : vector<16x5xf32>
    %330 = arith.addf %323, %329 : vector<16x5xf32>
    %c0_149 = arith.constant 0 : index
    %c6_150 = arith.constant 6 : index
    %331 = memref.load %arg1[%c0_149, %c6_150] : memref<1x21xf32, #tpu.memory_space<smem>>
    %c6_i32_151 = arith.constant 6 : i32
    %332 = arith.addi %0, %c6_i32_151 : i32
    %333 = arith.index_cast %332 : i32 to index
    %c0_152 = arith.constant 0 : index
    %334 = vector.load %arg4[%333, %c0_152] : memref<36x5xf32, #tpu.memory_space<vmem>>, vector<16x5xf32>
    %335 = vector.broadcast %331 : f32 to vector<16x5xf32>
    %336 = arith.mulf %335, %334 : vector<16x5xf32>
    %337 = arith.addf %330, %336 : vector<16x5xf32>
    %c0_153 = arith.constant 0 : index
    %c7_154 = arith.constant 7 : index
    %338 = memref.load %arg1[%c0_153, %c7_154] : memref<1x21xf32, #tpu.memory_space<smem>>
    %c7_i32_155 = arith.constant 7 : i32
    %339 = arith.addi %0, %c7_i32_155 : i32
    %340 = arith.index_cast %339 : i32 to index
    %c0_156 = arith.constant 0 : index
    %341 = vector.load %arg4[%340, %c0_156] : memref<36x5xf32, #tpu.memory_space<vmem>>, vector<16x5xf32>
    %342 = vector.broadcast %338 : f32 to vector<16x5xf32>
    %343 = arith.mulf %342, %341 : vector<16x5xf32>
    %344 = arith.addf %337, %343 : vector<16x5xf32>
    %c0_157 = arith.constant 0 : index
    %c8_158 = arith.constant 8 : index
    %345 = memref.load %arg1[%c0_157, %c8_158] : memref<1x21xf32, #tpu.memory_space<smem>>
    %c8_i32_159 = arith.constant 8 : i32
    %346 = arith.addi %0, %c8_i32_159 : i32
    %347 = arith.index_cast %346 : i32 to index
    %c0_160 = arith.constant 0 : index
    %348 = vector.load %arg4[%347, %c0_160] : memref<36x5xf32, #tpu.memory_space<vmem>>, vector<16x5xf32>
    %349 = vector.broadcast %345 : f32 to vector<16x5xf32>
    %350 = arith.mulf %349, %348 : vector<16x5xf32>
    %351 = arith.addf %344, %350 : vector<16x5xf32>
    %c0_161 = arith.constant 0 : index
    %c9_162 = arith.constant 9 : index
    %352 = memref.load %arg1[%c0_161, %c9_162] : memref<1x21xf32, #tpu.memory_space<smem>>
    %c9_i32_163 = arith.constant 9 : i32
    %353 = arith.addi %0, %c9_i32_163 : i32
    %354 = arith.index_cast %353 : i32 to index
    %c0_164 = arith.constant 0 : index
    %355 = vector.load %arg4[%354, %c0_164] : memref<36x5xf32, #tpu.memory_space<vmem>>, vector<16x5xf32>
    %356 = vector.broadcast %352 : f32 to vector<16x5xf32>
    %357 = arith.mulf %356, %355 : vector<16x5xf32>
    %358 = arith.addf %351, %357 : vector<16x5xf32>
    %c0_165 = arith.constant 0 : index
    %c10_166 = arith.constant 10 : index
    %359 = memref.load %arg1[%c0_165, %c10_166] : memref<1x21xf32, #tpu.memory_space<smem>>
    %c10_i32_167 = arith.constant 10 : i32
    %360 = arith.addi %0, %c10_i32_167 : i32
    %361 = arith.index_cast %360 : i32 to index
    %c0_168 = arith.constant 0 : index
    %362 = vector.load %arg4[%361, %c0_168] : memref<36x5xf32, #tpu.memory_space<vmem>>, vector<16x5xf32>
    %363 = vector.broadcast %359 : f32 to vector<16x5xf32>
    %364 = arith.mulf %363, %362 : vector<16x5xf32>
    %365 = arith.addf %358, %364 : vector<16x5xf32>
    %c0_169 = arith.constant 0 : index
    %c11_170 = arith.constant 11 : index
    %366 = memref.load %arg1[%c0_169, %c11_170] : memref<1x21xf32, #tpu.memory_space<smem>>
    %c11_i32_171 = arith.constant 11 : i32
    %367 = arith.addi %0, %c11_i32_171 : i32
    %368 = arith.index_cast %367 : i32 to index
    %c0_172 = arith.constant 0 : index
    %369 = vector.load %arg4[%368, %c0_172] : memref<36x5xf32, #tpu.memory_space<vmem>>, vector<16x5xf32>
    %370 = vector.broadcast %366 : f32 to vector<16x5xf32>
    %371 = arith.mulf %370, %369 : vector<16x5xf32>
    %372 = arith.addf %365, %371 : vector<16x5xf32>
    %c0_173 = arith.constant 0 : index
    %c12_174 = arith.constant 12 : index
    %373 = memref.load %arg1[%c0_173, %c12_174] : memref<1x21xf32, #tpu.memory_space<smem>>
    %c12_i32_175 = arith.constant 12 : i32
    %374 = arith.addi %0, %c12_i32_175 : i32
    %375 = arith.index_cast %374 : i32 to index
    %c0_176 = arith.constant 0 : index
    %376 = vector.load %arg4[%375, %c0_176] : memref<36x5xf32, #tpu.memory_space<vmem>>, vector<16x5xf32>
    %377 = vector.broadcast %373 : f32 to vector<16x5xf32>
    %378 = arith.mulf %377, %376 : vector<16x5xf32>
    %379 = arith.addf %372, %378 : vector<16x5xf32>
    %c0_177 = arith.constant 0 : index
    %c13_178 = arith.constant 13 : index
    %380 = memref.load %arg1[%c0_177, %c13_178] : memref<1x21xf32, #tpu.memory_space<smem>>
    %c13_i32_179 = arith.constant 13 : i32
    %381 = arith.addi %0, %c13_i32_179 : i32
    %382 = arith.index_cast %381 : i32 to index
    %c0_180 = arith.constant 0 : index
    %383 = vector.load %arg4[%382, %c0_180] : memref<36x5xf32, #tpu.memory_space<vmem>>, vector<16x5xf32>
    %384 = vector.broadcast %380 : f32 to vector<16x5xf32>
    %385 = arith.mulf %384, %383 : vector<16x5xf32>
    %386 = arith.addf %379, %385 : vector<16x5xf32>
    %c0_181 = arith.constant 0 : index
    %c14_182 = arith.constant 14 : index
    %387 = memref.load %arg1[%c0_181, %c14_182] : memref<1x21xf32, #tpu.memory_space<smem>>
    %c14_i32_183 = arith.constant 14 : i32
    %388 = arith.addi %0, %c14_i32_183 : i32
    %389 = arith.index_cast %388 : i32 to index
    %c0_184 = arith.constant 0 : index
    %390 = vector.load %arg4[%389, %c0_184] : memref<36x5xf32, #tpu.memory_space<vmem>>, vector<16x5xf32>
    %391 = vector.broadcast %387 : f32 to vector<16x5xf32>
    %392 = arith.mulf %391, %390 : vector<16x5xf32>
    %393 = arith.addf %386, %392 : vector<16x5xf32>
    %c0_185 = arith.constant 0 : index
    %c15_186 = arith.constant 15 : index
    %394 = memref.load %arg1[%c0_185, %c15_186] : memref<1x21xf32, #tpu.memory_space<smem>>
    %c15_i32_187 = arith.constant 15 : i32
    %395 = arith.addi %0, %c15_i32_187 : i32
    %396 = arith.index_cast %395 : i32 to index
    %c0_188 = arith.constant 0 : index
    %397 = vector.load %arg4[%396, %c0_188] : memref<36x5xf32, #tpu.memory_space<vmem>>, vector<16x5xf32>
    %398 = vector.broadcast %394 : f32 to vector<16x5xf32>
    %399 = arith.mulf %398, %397 : vector<16x5xf32>
    %400 = arith.addf %393, %399 : vector<16x5xf32>
    %c0_189 = arith.constant 0 : index
    %c16_190 = arith.constant 16 : index
    %401 = memref.load %arg1[%c0_189, %c16_190] : memref<1x21xf32, #tpu.memory_space<smem>>
    %c16_i32_191 = arith.constant 16 : i32
    %402 = arith.addi %0, %c16_i32_191 : i32
    %403 = arith.index_cast %402 : i32 to index
    %c0_192 = arith.constant 0 : index
    %404 = vector.load %arg4[%403, %c0_192] : memref<36x5xf32, #tpu.memory_space<vmem>>, vector<16x5xf32>
    %405 = vector.broadcast %401 : f32 to vector<16x5xf32>
    %406 = arith.mulf %405, %404 : vector<16x5xf32>
    %407 = arith.addf %400, %406 : vector<16x5xf32>
    %c0_193 = arith.constant 0 : index
    %c17_194 = arith.constant 17 : index
    %408 = memref.load %arg1[%c0_193, %c17_194] : memref<1x21xf32, #tpu.memory_space<smem>>
    %c17_i32_195 = arith.constant 17 : i32
    %409 = arith.addi %0, %c17_i32_195 : i32
    %410 = arith.index_cast %409 : i32 to index
    %c0_196 = arith.constant 0 : index
    %411 = vector.load %arg4[%410, %c0_196] : memref<36x5xf32, #tpu.memory_space<vmem>>, vector<16x5xf32>
    %412 = vector.broadcast %408 : f32 to vector<16x5xf32>
    %413 = arith.mulf %412, %411 : vector<16x5xf32>
    %414 = arith.addf %407, %413 : vector<16x5xf32>
    %c0_197 = arith.constant 0 : index
    %c18_198 = arith.constant 18 : index
    %415 = memref.load %arg1[%c0_197, %c18_198] : memref<1x21xf32, #tpu.memory_space<smem>>
    %c18_i32_199 = arith.constant 18 : i32
    %416 = arith.addi %0, %c18_i32_199 : i32
    %417 = arith.index_cast %416 : i32 to index
    %c0_200 = arith.constant 0 : index
    %418 = vector.load %arg4[%417, %c0_200] : memref<36x5xf32, #tpu.memory_space<vmem>>, vector<16x5xf32>
    %419 = vector.broadcast %415 : f32 to vector<16x5xf32>
    %420 = arith.mulf %419, %418 : vector<16x5xf32>
    %421 = arith.addf %414, %420 : vector<16x5xf32>
    %c0_201 = arith.constant 0 : index
    %c19_202 = arith.constant 19 : index
    %422 = memref.load %arg1[%c0_201, %c19_202] : memref<1x21xf32, #tpu.memory_space<smem>>
    %c19_i32_203 = arith.constant 19 : i32
    %423 = arith.addi %0, %c19_i32_203 : i32
    %424 = arith.index_cast %423 : i32 to index
    %c0_204 = arith.constant 0 : index
    %425 = vector.load %arg4[%424, %c0_204] : memref<36x5xf32, #tpu.memory_space<vmem>>, vector<16x5xf32>
    %426 = vector.broadcast %422 : f32 to vector<16x5xf32>
    %427 = arith.mulf %426, %425 : vector<16x5xf32>
    %428 = arith.addf %421, %427 : vector<16x5xf32>
    %c0_205 = arith.constant 0 : index
    %c20_206 = arith.constant 20 : index
    %429 = memref.load %arg1[%c0_205, %c20_206] : memref<1x21xf32, #tpu.memory_space<smem>>
    %c20_i32_207 = arith.constant 20 : i32
    %430 = arith.addi %0, %c20_i32_207 : i32
    %431 = arith.index_cast %430 : i32 to index
    %c0_208 = arith.constant 0 : index
    %432 = vector.load %arg4[%431, %c0_208] : memref<36x5xf32, #tpu.memory_space<vmem>>, vector<16x5xf32>
    %433 = vector.broadcast %429 : f32 to vector<16x5xf32>
    %434 = arith.mulf %433, %432 : vector<16x5xf32>
    %435 = arith.addf %428, %434 : vector<16x5xf32>
    %436 = vector.extract_strided_slice %145 {offsets = [0, 0], sizes = [16, 1], strides = [1, 1]} : vector<16x5xf32> to vector<16x1xf32>
    %437 = vector.extract_strided_slice %145 {offsets = [0, 1], sizes = [16, 4], strides = [1, 1]} : vector<16x5xf32> to vector<16x4xf32>
    %438 = vector.extract_strided_slice %290 {offsets = [0, 0], sizes = [16, 1], strides = [1, 1]} : vector<16x5xf32> to vector<16x1xf32>
    %439 = vector.extract_strided_slice %290 {offsets = [0, 1], sizes = [16, 4], strides = [1, 1]} : vector<16x5xf32> to vector<16x4xf32>
    %440 = vector.extract_strided_slice %435 {offsets = [0, 0], sizes = [16, 1], strides = [1, 1]} : vector<16x5xf32> to vector<16x1xf32>
    %441 = vector.extract_strided_slice %435 {offsets = [0, 1], sizes = [16, 4], strides = [1, 1]} : vector<16x5xf32> to vector<16x4xf32>
    %442 = arith.mulf %437, %437 : vector<16x4xf32>
    %443 = arith.mulf %439, %439 : vector<16x4xf32>
    %444 = arith.addf %442, %443 : vector<16x4xf32>
    %445 = arith.mulf %441, %441 : vector<16x4xf32>
    %446 = arith.addf %444, %445 : vector<16x4xf32>
    %cst = arith.constant 9.99999968E-21 : f32
    %447 = vector.broadcast %cst : f32 to vector<16x4xf32>
    %448 = arith.addf %446, %447 : vector<16x4xf32>
    %449 = math.rsqrt %448 : vector<16x4xf32>
    %c0_209 = arith.constant 0 : index
    %c0_210 = arith.constant 0 : index
    %450 = vector.load %arg5[%c0_209, %c0_210] : memref<1x4xf32, #tpu.memory_space<vmem>>, vector<1x4xf32>
    %451 = vector.broadcast %450 : vector<1x4xf32> to vector<16x4xf32>
    %452 = arith.mulf %451, %449 : vector<16x4xf32>
    %c0_211 = arith.constant 0 : index
    %c0_212 = arith.constant 0 : index
    %453 = vector.load %arg6[%c0_211, %c0_212] : memref<4x128xf32, #tpu.memory_space<vmem>>, vector<4x128xf32>
    %c0_213 = arith.constant 0 : index
    %c0_214 = arith.constant 0 : index
    %454 = vector.load %arg7[%c0_213, %c0_214] : memref<1x128xf32, #tpu.memory_space<vmem>>, vector<1x128xf32>
    %455 = arith.mulf %437, %452 : vector<16x4xf32>
    %456 = vector.broadcast %436 : vector<16x1xf32> to vector<16x128xf32>
    %457 = vector.broadcast %454 : vector<1x128xf32> to vector<16x128xf32>
    %458 = arith.mulf %456, %457 : vector<16x128xf32>
    %cst_215 = arith.constant dense<0.000000e+00> : vector<16x128xf32>
    %459 = tpu.matmul %455, %453, %cst_215 {dimension_numbers = #tpu.dot_dimension_numbers<[1], [0], [0], [1], [0, 0, 1, 1], [], []>} : vector<16x4xf32>, vector<4x128xf32>, vector<16x128xf32> -> vector<16x128xf32>
    %460 = arith.addf %458, %459 : vector<16x128xf32>
    %c0_216 = arith.constant 0 : index
    %c0_217 = arith.constant 0 : index
    %461 = vector.load %arg8[%c0_216, %c0_217] : memref<16x128xf32, #tpu.memory_space<vmem>>, vector<16x128xf32>
    tpu.vector_store %arg8[%c0_216, %c0_217], %460 {strides = array<i32>} : memref<16x128xf32, #tpu.memory_space<vmem>>, vector<16x128xf32>,
    %462 = vector.extract_strided_slice %460 {offsets = [1, 0], sizes = [15, 128], strides = [1, 1]} : vector<16x128xf32> to vector<15x128xf32>
    %463 = vector.extract_strided_slice %460 {offsets = [0, 0], sizes = [15, 128], strides = [1, 1]} : vector<16x128xf32> to vector<15x128xf32>
    %464 = arith.subf %462, %463 : vector<15x128xf32>
    %465 = arith.mulf %464, %464 : vector<15x128xf32>
    %466 = vector.shape_cast %465 : vector<15x128xf32> to vector<1x15x128xf32>
    %cst_218 = arith.constant dense<0.000000e+00> : vector<1xf32>
    %467 = vector.multi_reduction <add>, %466, %cst_218 [1, 2] : vector<1x15x128xf32> to vector<1xf32>
    %468 = vector.shape_cast %467 : vector<1xf32> to vector<1x1x1xf32>
    %469 = vector.extract %468[0, 0, 0] : f32 from vector<1x1x1xf32>
    %470 = arith.mulf %439, %452 : vector<16x4xf32>
    %471 = vector.broadcast %438 : vector<16x1xf32> to vector<16x128xf32>
    %472 = vector.broadcast %454 : vector<1x128xf32> to vector<16x128xf32>
    %473 = arith.mulf %471, %472 : vector<16x128xf32>
    %cst_219 = arith.constant dense<0.000000e+00> : vector<16x128xf32>
    %474 = tpu.matmul %470, %453, %cst_219 {dimension_numbers = #tpu.dot_dimension_numbers<[1], [0], [0], [1], [0, 0, 1, 1], [], []>} : vector<16x4xf32>, vector<4x128xf32>, vector<16x128xf32> -> vector<16x128xf32>
    %475 = arith.addf %473, %474 : vector<16x128xf32>
    %c0_220 = arith.constant 0 : index
    %c0_221 = arith.constant 0 : index
    %476 = vector.load %arg9[%c0_220, %c0_221] : memref<16x128xf32, #tpu.memory_space<vmem>>, vector<16x128xf32>
    tpu.vector_store %arg9[%c0_220, %c0_221], %475 {strides = array<i32>} : memref<16x128xf32, #tpu.memory_space<vmem>>, vector<16x128xf32>,
    %477 = vector.extract_strided_slice %475 {offsets = [1, 0], sizes = [15, 128], strides = [1, 1]} : vector<16x128xf32> to vector<15x128xf32>
    %478 = vector.extract_strided_slice %475 {offsets = [0, 0], sizes = [15, 128], strides = [1, 1]} : vector<16x128xf32> to vector<15x128xf32>
    %479 = arith.subf %477, %478 : vector<15x128xf32>
    %480 = arith.mulf %479, %479 : vector<15x128xf32>
    %481 = vector.shape_cast %480 : vector<15x128xf32> to vector<1x15x128xf32>
    %cst_222 = arith.constant dense<0.000000e+00> : vector<1xf32>
    %482 = vector.multi_reduction <add>, %481, %cst_222 [1, 2] : vector<1x15x128xf32> to vector<1xf32>
    %483 = vector.shape_cast %482 : vector<1xf32> to vector<1x1x1xf32>
    %484 = vector.extract %483[0, 0, 0] : f32 from vector<1x1x1xf32>
    %485 = arith.addf %469, %484 : f32
    %486 = arith.mulf %441, %452 : vector<16x4xf32>
    %487 = vector.broadcast %440 : vector<16x1xf32> to vector<16x128xf32>
    %488 = vector.broadcast %454 : vector<1x128xf32> to vector<16x128xf32>
    %489 = arith.mulf %487, %488 : vector<16x128xf32>
    %cst_223 = arith.constant dense<0.000000e+00> : vector<16x128xf32>
    %490 = tpu.matmul %486, %453, %cst_223 {dimension_numbers = #tpu.dot_dimension_numbers<[1], [0], [0], [1], [0, 0, 1, 1], [], []>} : vector<16x4xf32>, vector<4x128xf32>, vector<16x128xf32> -> vector<16x128xf32>
    %491 = arith.addf %489, %490 : vector<16x128xf32>
    %c0_224 = arith.constant 0 : index
    %c0_225 = arith.constant 0 : index
    %492 = vector.load %arg10[%c0_224, %c0_225] : memref<16x128xf32, #tpu.memory_space<vmem>>, vector<16x128xf32>
    tpu.vector_store %arg10[%c0_224, %c0_225], %491 {strides = array<i32>} : memref<16x128xf32, #tpu.memory_space<vmem>>, vector<16x128xf32>,
    %493 = vector.extract_strided_slice %491 {offsets = [1, 0], sizes = [15, 128], strides = [1, 1]} : vector<16x128xf32> to vector<15x128xf32>
    %494 = vector.extract_strided_slice %491 {offsets = [0, 0], sizes = [15, 128], strides = [1, 1]} : vector<16x128xf32> to vector<15x128xf32>
    %495 = arith.subf %493, %494 : vector<15x128xf32>
    %496 = arith.mulf %495, %495 : vector<15x128xf32>
    %497 = vector.shape_cast %496 : vector<15x128xf32> to vector<1x15x128xf32>
    %cst_226 = arith.constant dense<0.000000e+00> : vector<1xf32>
    %498 = vector.multi_reduction <add>, %497, %cst_226 [1, 2] : vector<1x15x128xf32> to vector<1xf32>
    %499 = vector.shape_cast %498 : vector<1xf32> to vector<1x1x1xf32>
    %500 = vector.extract %499[0, 0, 0] : f32 from vector<1x1x1xf32>
    %501 = arith.addf %485, %500 : f32
    %c0_227 = arith.constant 0 : index
    %c0_228 = arith.constant 0 : index
    %502 = memref.load %arg11[%c0_227, %c0_228] : memref<1x1xf32, #tpu.memory_space<smem>>
    memref.store %501, %arg11[%c0_227, %c0_228] : memref<1x1xf32, #tpu.memory_space<smem>>
    return
  }
  func.func @transform_0(%arg0: i32) -> (i32, i32) {
    %c0_i32 = arith.constant 0 : i32
    %c0_i32_0 = arith.constant 0 : i32
    %c0_i32_1 = arith.constant 0 : i32
    return %c0_i32, %c0_i32_0 : i32, i32
  }
  func.func @transform_1(%arg0: i32) -> (i32, i32) {
    %c0_i32 = arith.constant 0 : i32
    %c0_i32_0 = arith.constant 0 : i32
    %c0_i32_1 = arith.constant 0 : i32
    return %c0_i32, %c0_i32_0 : i32, i32
  }
  func.func @transform_2(%arg0: i32) -> (i32, i32) {
    %c0_i32 = arith.constant 0 : i32
    %c0_i32_0 = arith.constant 0 : i32
    %c0_i32_1 = arith.constant 0 : i32
    return %c0_i32, %c0_i32_0 : i32, i32
  }
  func.func @transform_3(%arg0: i32) -> (i32, i32) {
    %c0_i32 = arith.constant 0 : i32
    %c0_i32_0 = arith.constant 0 : i32
    %c0_i32_1 = arith.constant 0 : i32
    return %c0_i32, %c0_i32_0 : i32, i32
  }
  func.func @transform_4(%arg0: i32) -> (i32, i32) {
    %c0_i32 = arith.constant 0 : i32
    %c0_i32_0 = arith.constant 0 : i32
    %c0_i32_1 = arith.constant 0 : i32
    return %c0_i32, %c0_i32_0 : i32, i32
  }
  func.func @transform_5(%arg0: i32) -> (i32, i32) {
    %c0_i32 = arith.constant 0 : i32
    %c0_i32_0 = arith.constant 0 : i32
    %c0_i32_1 = arith.constant 0 : i32
    return %c0_i32, %c0_i32_0 : i32, i32
  }
  func.func @transform_6(%arg0: i32) -> (i32, i32) {
    %c0_i32 = arith.constant 0 : i32
    %c0_i32_0 = arith.constant 0 : i32
    %c0_i32_1 = arith.constant 0 : i32
    return %c0_i32, %c0_i32_0 : i32, i32
  }
  func.func @transform_7(%arg0: i32) -> (i32, i32) {
    %c0_i32 = arith.constant 0 : i32
    %c0_i32_0 = arith.constant 0 : i32
    return %arg0, %c0_i32 : i32, i32
  }
  func.func @transform_8(%arg0: i32) -> (i32, i32) {
    %c0_i32 = arith.constant 0 : i32
    %c0_i32_0 = arith.constant 0 : i32
    return %arg0, %c0_i32 : i32, i32
  }
  func.func @transform_9(%arg0: i32) -> (i32, i32) {
    %c0_i32 = arith.constant 0 : i32
    %c0_i32_0 = arith.constant 0 : i32
    return %arg0, %c0_i32 : i32, i32
  }
  func.func @transform_10(%arg0: i32) -> (i32, i32) {
    %c0_i32 = arith.constant 0 : i32
    %c0_i32_0 = arith.constant 0 : i32
    return %arg0, %c0_i32 : i32, i32
  }
}

</mosaic_0001>

<llo_original>
// kernel: tpu_custom_call.1
$region0: #{tpu_custom_call.1}
  #allocation0 [shape = 'u32[]', space=smem, size = 0x4, offset = 0x4, fixed_abs, tag = 'smem constant byte address 0x4 - core index']
  #allocation1 [shape = 'u32[144,128]{1,0:T(1,128)}', space=vmem, size = 0x12000, scoped, tag = 'internal scratch']
  %s0 = inlined_call_operand.vmem [shape: f32[1,21], index: 0, kind: input, shape index: {}]
  %s1 = inlined_call_operand.vmem [shape: f32[36,5], index: 1, kind: input, shape index: {}]
  %s2 = inlined_call_operand.vmem [shape: f32[36,5], index: 2, kind: input, shape index: {}]
  %s3 = inlined_call_operand.vmem [shape: f32[36,5], index: 3, kind: input, shape index: {}]
  %s4 = inlined_call_operand.vmem [shape: f32[1,4], index: 4, kind: input, shape index: {}]
  %s5 = inlined_call_operand.vmem [shape: f32[4,128], index: 5, kind: input, shape index: {}]
  %s6 = inlined_call_operand.vmem [shape: f32[1,128], index: 6, kind: input, shape index: {}]
  %s7 = inlined_call_operand.hbm [shape: f32[16,128], index: 7, kind: output, shape index: {0}]
  %s8 = inlined_call_operand.hbm [shape: f32[16,128], index: 8, kind: output, shape index: {1}]
  %s9 = inlined_call_operand.hbm [shape: f32[16,128], index: 9, kind: output, shape index: {2}]
  %s10 = inlined_call_operand.hbm [shape: f32[1,1], index: 10, kind: output, shape index: {3}]
  %11 = xla_tuple %s7, %s8, %s9, %s10
  %s12 = sld [smem:[#allocation0]]
  $region66: #{tpu_custom_call.1} parent=0
    _
  %s14 = ssub.s32 1, %s12
  %s15 = scalar_select 0, %s14, %s12
  $region1: #{tpu_custom_call.1} parent=0
    #allocation2 [shape = 'u8[512]{0}', space=smem, size = 0x200, scoped, tag = 'input window, operand 0, single buffered']
    #allocation3 [shape = 's32[1]{0}', space=sflag, size = 0x4, scoped, tag = 'scoped memory for tpu_custom_call.1']
    #allocation4 [shape = 's32[1]{0}', space=sflag, size = 0x4, scoped, tag = 'scoped memory for tpu_custom_call.1']
    #allocation5 [shape = 's32[1]{0}', space=sflag, size = 0x4, scoped, tag = 'scoped memory for tpu_custom_call.1']
    #allocation6 [shape = 'u8[8192]{0}', space=vmem, size = 0x2000, scoped, tag = 'output window, operand 0, single buffered']
    #allocation7 [shape = 'u8[8192]{0}', space=vmem, size = 0x2000, scoped, tag = 'output window, operand 1, single buffered']
    #allocation8 [shape = 's32[1]{0}', space=sflag, size = 0x4, scoped, tag = 'scoped memory for tpu_custom_call.1']
    #allocation9 [shape = 'u8[8192]{0}', space=vmem, size = 0x2000, scoped, tag = 'output window, operand 2, single buffered']
    #allocation10 [shape = 'u8[512]{0}', space=smem, size = 0x200, scoped, tag = 'output window, operand 3, single buffered']
    %16 = vsyncpa [#allocation5], 0
    %17 = vsyncpa [#allocation3], 0
    %18 = vsyncpa [#allocation8], 0
    %19 = vsyncpa [#allocation4], 0
    // Predicated region
    $region2: #{tpu_custom_call.1} parent=1 // pred_check
      _
    $region3: #{tpu_custom_call.1} parent=1 // pred_check_branch
      %21 = sbr.rel (0) target = $region5
    $region4: #{tpu_custom_call.1} parent=1 // pred_region
      %s23 = ssub.s32 16, 16
      %24 = vsyncadd [#allocation5], %s23
      %s26 = sshll.u32 %s0, 4
      %s27 = int_to_ptr.vmem [resolvable:$true] %s26
      %29 = dma.vmem_to_smem %s27, 16, [#allocation2], [#allocation5]
    $region5: #{tpu_custom_call.1} parent=1 // pred_fallthru
      _
    // Predicated region
    $region6: #{tpu_custom_call.1} parent=1 // pred_check
      _
    $region7: #{tpu_custom_call.1} parent=1 // pred_check_branch
      %31 = sbr.rel (0) target = $region9
    $region8: #{tpu_custom_call.1} parent=1 // pred_region
      _
    $region9: #{tpu_custom_call.1} parent=1 // pred_fallthru
      _
    // Predicated region
    $region10: #{tpu_custom_call.1} parent=1 // pred_check
      _
    $region11: #{tpu_custom_call.1} parent=1 // pred_check_branch
      %33 = sbr.rel (0) target = $region13
    $region12: #{tpu_custom_call.1} parent=1 // pred_region
      _
    $region13: #{tpu_custom_call.1} parent=1 // pred_fallthru
      _
    // Predicated region
    $region14: #{tpu_custom_call.1} parent=1 // pred_check
      _
    $region15: #{tpu_custom_call.1} parent=1 // pred_check_branch
      %35 = sbr.rel (0) target = $region17
    $region16: #{tpu_custom_call.1} parent=1 // pred_region
      _
    $region17: #{tpu_custom_call.1} parent=1 // pred_fallthru
      _
    // Predicated region
    $region18: #{tpu_custom_call.1} parent=1 // pred_check
      _
    $region19: #{tpu_custom_call.1} parent=1 // pred_check_branch
      %37 = sbr.rel (0) target = $region21
    $region20: #{tpu_custom_call.1} parent=1 // pred_region
      _
    $region21: #{tpu_custom_call.1} parent=1 // pred_fallthru
      _
    // Predicated region
    $region22: #{tpu_custom_call.1} parent=1 // pred_check
      _
    $region23: #{tpu_custom_call.1} parent=1 // pred_check_branch
      %39 = sbr.rel (0) target = $region25
    $region24: #{tpu_custom_call.1} parent=1 // pred_region
      _
    $region25: #{tpu_custom_call.1} parent=1 // pred_fallthru
      _
    // Predicated region
    $region26: #{tpu_custom_call.1} parent=1 // pred_check
      _
    $region27: #{tpu_custom_call.1} parent=1 // pred_check_branch
      %41 = sbr.rel (0) target = $region29
    $region28: #{tpu_custom_call.1} parent=1 // pred_region
      _
    $region29: #{tpu_custom_call.1} parent=1 // pred_fallthru
      _
    // Predicated region
    $region30: #{tpu_custom_call.1} parent=1 // pred_check
      _
    $region31: #{tpu_custom_call.1} parent=1 // pred_check_branch
      %43 = sbr.rel (0) target = $region33
    $region32: #{tpu_custom_call.1} parent=1 // pred_region
      %44 = dma.done [#allocation5], 16
    $region33: #{tpu_custom_call.1} parent=1 // pred_fallthru
      _
    %45 = sfence
    %s46 = smul.u32 0, 16
    %s47 = sld [smem:[#allocation2]]
    %s48 = scalar_lea.vmem %s1, %s46
    %v49 = vld [vmem:[%s48] sm:$0xff]
    %v50 = vld [vmem:[%s48 + $0x8] sm:$0xff]
    %v51 = vstv %s47
    %v52 = vmul.f32 %v51, %v49
    %v53 = vmul.f32 %v51, %v50
    %s54 = sld [smem:[#allocation2 + $0x1]]
    %s55 = sadd.s32 %s46, 1
    %s56 = scalar_lea.vmem %s1, %s55
    %v57 = vld [vmem:[%s56] sm:$0xff]
    %v58 = vld [vmem:[%s56 + $0x8] sm:$0xff]
    %v59 = vstv %s54
    %v60 = vmul.f32 %v59, %v57
    %v61 = vmul.f32 %v59, %v58
    %v62 = vadd.f32 %v52, %v60
    %v63 = vadd.f32 %v53, %v61
    %s64 = sld [smem:[#allocation2 + $0x2]]
    %s65 = sadd.s32 %s46, 2
    %s66 = scalar_lea.vmem %s1, %s65
    %v67 = vld [vmem:[%s66] sm:$0xff]
    %v68 = vld [vmem:[%s66 + $0x8] sm:$0xff]
    %v69 = vstv %s64
    %v70 = vmul.f32 %v69, %v67
    %v71 = vmul.f32 %v69, %v68
    %v72 = vadd.f32 %v62, %v70
    %v73 = vadd.f32 %v63, %v71
    %s74 = sld [smem:[#allocation2 + $0x3]]
    %s75 = sadd.s32 %s46, 3
    %s76 = scalar_lea.vmem %s1, %s75
    %v77 = vld [vmem:[%s76] sm:$0xff]
    %v78 = vld [vmem:[%s76 + $0x8] sm:$0xff]
    %v79 = vstv %s74
    %v80 = vmul.f32 %v79, %v77
    %v81 = vmul.f32 %v79, %v78
    %v82 = vadd.f32 %v72, %v80
    %v83 = vadd.f32 %v73, %v81
    %s84 = sld [smem:[#allocation2 + $0x4]]
    %s85 = sadd.s32 %s46, 4
    %s86 = scalar_lea.vmem %s1, %s85
    %v87 = vld [vmem:[%s86] sm:$0xff]
    %v88 = vld [vmem:[%s86 + $0x8] sm:$0xff]
    %v89 = vstv %s84
    %v90 = vmul.f32 %v89, %v87
    %v91 = vmul.f32 %v89, %v88
    %v92 = vadd.f32 %v82, %v90
    %v93 = vadd.f32 %v83, %v91
    %s94 = sld [smem:[#allocation2 + $0x5]]
    %s95 = sadd.s32 %s46, 5
    %s96 = scalar_lea.vmem %s1, %s95
    %v97 = vld [vmem:[%s96] sm:$0xff]
    %v98 = vld [vmem:[%s96 + $0x8] sm:$0xff]
    %v99 = vstv %s94
    %v100 = vmul.f32 %v99, %v97
    %v101 = vmul.f32 %v99, %v98
    %v102 = vadd.f32 %v92, %v100
    %v103 = vadd.f32 %v93, %v101
    %s104 = sld [smem:[#allocation2 + $0x6]]
    %s105 = sadd.s32 %s46, 6
    %s106 = scalar_lea.vmem %s1, %s105
    %v107 = vld [vmem:[%s106] sm:$0xff]
    %v108 = vld [vmem:[%s106 + $0x8] sm:$0xff]
    %v109 = vstv %s104
    %v110 = vmul.f32 %v109, %v107
    %v111 = vmul.f32 %v109, %v108
    %v112 = vadd.f32 %v102, %v110
    %v113 = vadd.f32 %v103, %v111
    %s114 = sld [smem:[#allocation2 + $0x7]]
    %s115 = sadd.s32 %s46, 7
    %s116 = scalar_lea.vmem %s1, %s115
    %v117 = vld [vmem:[%s116] sm:$0xff]
    %v118 = vld [vmem:[%s116 + $0x8] sm:$0xff]
    %v119 = vstv %s114
    %v120 = vmul.f32 %v119, %v117
    %v121 = vmul.f32 %v119, %v118
    %v122 = vadd.f32 %v112, %v120
    %v123 = vadd.f32 %v113, %v121
    %s124 = sld [smem:[#allocation2 + $0x8]]
    %s125 = sadd.s32 %s46, 8
    %s126 = scalar_lea.vmem %s1, %s125
    %v127 = vld [vmem:[%s126] sm:$0xff]
    %v128 = vld [vmem:[%s126 + $0x8] sm:$0xff]
    %v129 = vstv %s124
    %v130 = vmul.f32 %v129, %v127
    %v131 = vmul.f32 %v129, %v128
    %v132 = vadd.f32 %v122, %v130
    %v133 = vadd.f32 %v123, %v131
    %s134 = sld [smem:[#allocation2 + $0x9]]
    %s135 = sadd.s32 %s46, 9
    %s136 = scalar_lea.vmem %s1, %s135
    %v137 = vld [vmem:[%s136] sm:$0xff]
    %v138 = vld [vmem:[%s136 + $0x8] sm:$0xff]
    %v139 = vstv %s134
    %v140 = vmul.f32 %v139, %v137
    %v141 = vmul.f32 %v139, %v138
    %v142 = vadd.f32 %v132, %v140
    %v143 = vadd.f32 %v133, %v141
    %s144 = sld [smem:[#allocation2 + $0xa]]
    %s145 = sadd.s32 %s46, 10
    %s146 = scalar_lea.vmem %s1, %s145
    %v147 = vld [vmem:[%s146] sm:$0xff]
    %v148 = vld [vmem:[%s146 + $0x8] sm:$0xff]
    %v149 = vstv %s144
    %v150 = vmul.f32 %v149, %v147
    %v151 = vmul.f32 %v149, %v148
    %v152 = vadd.f32 %v142, %v150
    %v153 = vadd.f32 %v143, %v151
    %s154 = sld [smem:[#allocation2 + $0xb]]
    %s155 = sadd.s32 %s46, 11
    %s156 = scalar_lea.vmem %s1, %s155
    %v157 = vld [vmem:[%s156] sm:$0xff]
    %v158 = vld [vmem:[%s156 + $0x8] sm:$0xff]
    %v159 = vstv %s154
    %v160 = vmul.f32 %v159, %v157
    %v161 = vmul.f32 %v159, %v158
    %v162 = vadd.f32 %v152, %v160
    %v163 = vadd.f32 %v153, %v161
    %s164 = sld [smem:[#allocation2 + $0xc]]
    %s165 = sadd.s32 %s46, 12
    %s166 = scalar_lea.vmem %s1, %s165
    %v167 = vld [vmem:[%s166] sm:$0xff]
    %v168 = vld [vmem:[%s166 + $0x8] sm:$0xff]
    %v169 = vstv %s164
    %v170 = vmul.f32 %v169, %v167
    %v171 = vmul.f32 %v169, %v168
    %v172 = vadd.f32 %v162, %v170
    %v173 = vadd.f32 %v163, %v171
    %s174 = sld [smem:[#allocation2 + $0xd]]
    %s175 = sadd.s32 %s46, 13
    %s176 = scalar_lea.vmem %s1, %s175
    %v177 = vld [vmem:[%s176] sm:$0xff]
    %v178 = vld [vmem:[%s176 + $0x8] sm:$0xff]
    %v179 = vstv %s174
    %v180 = vmul.f32 %v179, %v177
    %v181 = vmul.f32 %v179, %v178
    %v182 = vadd.f32 %v172, %v180
    %v183 = vadd.f32 %v173, %v181
    %s184 = sld [smem:[#allocation2 + $0xe]]
    %s185 = sadd.s32 %s46, 14
    %s186 = scalar_lea.vmem %s1, %s185
    %v187 = vld [vmem:[%s186] sm:$0xff]
    %v188 = vld [vmem:[%s186 + $0x8] sm:$0xff]
    %v189 = vstv %s184
    %v190 = vmul.f32 %v189, %v187
    %v191 = vmul.f32 %v189, %v188
    %v192 = vadd.f32 %v182, %v190
    %v193 = vadd.f32 %v183, %v191
    %s194 = sld [smem:[#allocation2 + $0xf]]
    %s195 = sadd.s32 %s46, 15
    %s196 = scalar_lea.vmem %s1, %s195
    %v197 = vld [vmem:[%s196] sm:$0xff]
    %v198 = vld [vmem:[%s196 + $0x8] sm:$0xff]
    %v199 = vstv %s194
    %v200 = vmul.f32 %v199, %v197
    %v201 = vmul.f32 %v199, %v198
    %v202 = vadd.f32 %v192, %v200
    %v203 = vadd.f32 %v193, %v201
    %s204 = sld [smem:[#allocation2 + $0x10]]
    %s205 = sadd.s32 %s46, 16
    %s206 = scalar_lea.vmem %s1, %s205
    %v207 = vld [vmem:[%s206] sm:$0xff]
    %v208 = vld [vmem:[%s206 + $0x8] sm:$0xff]
    %v209 = vstv %s204
    %v210 = vmul.f32 %v209, %v207
    %v211 = vmul.f32 %v209, %v208
    %v212 = vadd.f32 %v202, %v210
    %v213 = vadd.f32 %v203, %v211
    %s214 = sld [smem:[#allocation2 + $0x11]]
    %s215 = sadd.s32 %s46, 17
    %s216 = scalar_lea.vmem %s1, %s215
    %v217 = vld [vmem:[%s216] sm:$0xff]
    %v218 = vld [vmem:[%s216 + $0x8] sm:$0xff]
    %v219 = vstv %s214
    %v220 = vmul.f32 %v219, %v217
    %v221 = vmul.f32 %v219, %v218
    %v222 = vadd.f32 %v212, %v220
    %v223 = vadd.f32 %v213, %v221
    %s224 = sld [smem:[#allocation2 + $0x12]]
    %s225 = sadd.s32 %s46, 18
    %s226 = scalar_lea.vmem %s1, %s225
    %v227 = vld [vmem:[%s226] sm:$0xff]
    %v228 = vld [vmem:[%s226 + $0x8] sm:$0xff]
    %v229 = vstv %s224
    %v230 = vmul.f32 %v229, %v227
    %v231 = vmul.f32 %v229, %v228
    %v232 = vadd.f32 %v222, %v230
    %v233 = vadd.f32 %v223, %v231
    %s234 = sld [smem:[#allocation2 + $0x13]]
    %s235 = sadd.s32 %s46, 19
    %s236 = scalar_lea.vmem %s1, %s235
    %v237 = vld [vmem:[%s236] sm:$0xff]
    %v238 = vld [vmem:[%s236 + $0x8] sm:$0xff]
    %v239 = vstv %s234
    %v240 = vmul.f32 %v239, %v237
    %v241 = vmul.f32 %v239, %v238
    %v242 = vadd.f32 %v232, %v240
    %v243 = vadd.f32 %v233, %v241
    %s244 = sld [smem:[#allocation2 + $0x14]]
    %s245 = sadd.s32 %s46, 20
    %s246 = scalar_lea.vmem %s1, %s245
    %v247 = vld [vmem:[%s246] sm:$0xff]
    %v248 = vld [vmem:[%s246 + $0x8] sm:$0xff]
    %v249 = vstv %s244
    %v250 = vmul.f32 %v249, %v247
    %v251 = vmul.f32 %v249, %v248
    %v252 = vadd.f32 %v242, %v250
    %v253 = vadd.f32 %v243, %v251
    %s254 = scalar_lea.vmem %s2, %s46
    %v255 = vld [vmem:[%s254] sm:$0xff]
    %v256 = vld [vmem:[%s254 + $0x8] sm:$0xff]
    %v257 = vmul.f32 %v51, %v255
    %v258 = vmul.f32 %v51, %v256
    %s259 = scalar_lea.vmem %s2, %s55
    %v260 = vld [vmem:[%s259] sm:$0xff]
    %v261 = vld [vmem:[%s259 + $0x8] sm:$0xff]
    %v262 = vmul.f32 %v59, %v260
    %v263 = vmul.f32 %v59, %v261
    %v264 = vadd.f32 %v257, %v262
    %v265 = vadd.f32 %v258, %v263
    %s266 = scalar_lea.vmem %s2, %s65
    %v267 = vld [vmem:[%s266] sm:$0xff]
    %v268 = vld [vmem:[%s266 + $0x8] sm:$0xff]
    %v269 = vmul.f32 %v69, %v267
    %v270 = vmul.f32 %v69, %v268
    %v271 = vadd.f32 %v264, %v269
    %v272 = vadd.f32 %v265, %v270
    %s273 = scalar_lea.vmem %s2, %s75
    %v274 = vld [vmem:[%s273] sm:$0xff]
    %v275 = vld [vmem:[%s273 + $0x8] sm:$0xff]
    %v276 = vmul.f32 %v79, %v274
    %v277 = vmul.f32 %v79, %v275
    %v278 = vadd.f32 %v271, %v276
    %v279 = vadd.f32 %v272, %v277
    %s280 = scalar_lea.vmem %s2, %s85
    %v281 = vld [vmem:[%s280] sm:$0xff]
    %v282 = vld [vmem:[%s280 + $0x8] sm:$0xff]
    %v283 = vmul.f32 %v89, %v281
    %v284 = vmul.f32 %v89, %v282
    %v285 = vadd.f32 %v278, %v283
    %v286 = vadd.f32 %v279, %v284
    %s287 = scalar_lea.vmem %s2, %s95
    %v288 = vld [vmem:[%s287] sm:$0xff]
    %v289 = vld [vmem:[%s287 + $0x8] sm:$0xff]
    %v290 = vmul.f32 %v99, %v288
    %v291 = vmul.f32 %v99, %v289
    %v292 = vadd.f32 %v285, %v290
    %v293 = vadd.f32 %v286, %v291
    %s294 = scalar_lea.vmem %s2, %s105
    %v295 = vld [vmem:[%s294] sm:$0xff]
    %v296 = vld [vmem:[%s294 + $0x8] sm:$0xff]
    %v297 = vmul.f32 %v109, %v295
    %v298 = vmul.f32 %v109, %v296
    %v299 = vadd.f32 %v292, %v297
    %v300 = vadd.f32 %v293, %v298
    %s301 = scalar_lea.vmem %s2, %s115
    %v302 = vld [vmem:[%s301] sm:$0xff]
    %v303 = vld [vmem:[%s301 + $0x8] sm:$0xff]
    %v304 = vmul.f32 %v119, %v302
    %v305 = vmul.f32 %v119, %v303
    %v306 = vadd.f32 %v299, %v304
    %v307 = vadd.f32 %v300, %v305
    %s308 = scalar_lea.vmem %s2, %s125
    %v309 = vld [vmem:[%s308] sm:$0xff]
    %v310 = vld [vmem:[%s308 + $0x8] sm:$0xff]
    %v311 = vmul.f32 %v129, %v309
    %v312 = vmul.f32 %v129, %v310
    %v313 = vadd.f32 %v306, %v311
    %v314 = vadd.f32 %v307, %v312
    %s315 = scalar_lea.vmem %s2, %s135
    %v316 = vld [vmem:[%s315] sm:$0xff]
    %v317 = vld [vmem:[%s315 + $0x8] sm:$0xff]
    %v318 = vmul.f32 %v139, %v316
    %v319 = vmul.f32 %v139, %v317
    %v320 = vadd.f32 %v313, %v318
    %v321 = vadd.f32 %v314, %v319
    %s322 = scalar_lea.vmem %s2, %s145
    %v323 = vld [vmem:[%s322] sm:$0xff]
    %v324 = vld [vmem:[%s322 + $0x8] sm:$0xff]
    %v325 = vmul.f32 %v149, %v323
    %v326 = vmul.f32 %v149, %v324
    %v327 = vadd.f32 %v320, %v325
    %v328 = vadd.f32 %v321, %v326
    %s329 = scalar_lea.vmem %s2, %s155
    %v330 = vld [vmem:[%s329] sm:$0xff]
    %v331 = vld [vmem:[%s329 + $0x8] sm:$0xff]
    %v332 = vmul.f32 %v159, %v330
    %v333 = vmul.f32 %v159, %v331
    %v334 = vadd.f32 %v327, %v332
    %v335 = vadd.f32 %v328, %v333
    %s336 = scalar_lea.vmem %s2, %s165
    %v337 = vld [vmem:[%s336] sm:$0xff]
    %v338 = vld [vmem:[%s336 + $0x8] sm:$0xff]
    %v339 = vmul.f32 %v169, %v337
    %v340 = vmul.f32 %v169, %v338
    %v341 = vadd.f32 %v334, %v339
    %v342 = vadd.f32 %v335, %v340
    %s343 = scalar_lea.vmem %s2, %s175
    %v344 = vld [vmem:[%s343] sm:$0xff]
    %v345 = vld [vmem:[%s343 + $0x8] sm:$0xff]
    %v346 = vmul.f32 %v179, %v344
    %v347 = vmul.f32 %v179, %v345
    %v348 = vadd.f32 %v341, %v346
    %v349 = vadd.f32 %v342, %v347
    %s350 = scalar_lea.vmem %s2, %s185
    %v351 = vld [vmem:[%s350] sm:$0xff]
    %v352 = vld [vmem:[%s350 + $0x8] sm:$0xff]
    %v353 = vmul.f32 %v189, %v351
    %v354 = vmul.f32 %v189, %v352
    %v355 = vadd.f32 %v348, %v353
    %v356 = vadd.f32 %v349, %v354
    %s357 = scalar_lea.vmem %s2, %s195
    %v358 = vld [vmem:[%s357] sm:$0xff]
    %v359 = vld [vmem:[%s357 + $0x8] sm:$0xff]
    %v360 = vmul.f32 %v199, %v358
    %v361 = vmul.f32 %v199, %v359
    %v362 = vadd.f32 %v355, %v360
    %v363 = vadd.f32 %v356, %v361
    %s364 = scalar_lea.vmem %s2, %s205
    %v365 = vld [vmem:[%s364] sm:$0xff]
    %v366 = vld [vmem:[%s364 + $0x8] sm:$0xff]
    %v367 = vmul.f32 %v209, %v365
    %v368 = vmul.f32 %v209, %v366
    %v369 = vadd.f32 %v362, %v367
    %v370 = vadd.f32 %v363, %v368
    %s371 = scalar_lea.vmem %s2, %s215
    %v372 = vld [vmem:[%s371] sm:$0xff]
    %v373 = vld [vmem:[%s371 + $0x8] sm:$0xff]
    %v374 = vmul.f32 %v219, %v372
    %v375 = vmul.f32 %v219, %v373
    %v376 = vadd.f32 %v369, %v374
    %v377 = vadd.f32 %v370, %v375
    %s378 = scalar_lea.vmem %s2, %s225
    %v379 = vld [vmem:[%s378] sm:$0xff]
    %v380 = vld [vmem:[%s378 + $0x8] sm:$0xff]
    %v381 = vmul.f32 %v229, %v379
    %v382 = vmul.f32 %v229, %v380
    %v383 = vadd.f32 %v376, %v381
    %v384 = vadd.f32 %v377, %v382
    %s385 = scalar_lea.vmem %s2, %s235
    %v386 = vld [vmem:[%s385] sm:$0xff]
    %v387 = vld [vmem:[%s385 + $0x8] sm:$0xff]
    %v388 = vmul.f32 %v239, %v386
    %v389 = vmul.f32 %v239, %v387
    %v390 = vadd.f32 %v383, %v388
    %v391 = vadd.f32 %v384, %v389
    %s392 = scalar_lea.vmem %s2, %s245
    %v393 = vld [vmem:[%s392] sm:$0xff]
    %v394 = vld [vmem:[%s392 + $0x8] sm:$0xff]
    %v395 = vmul.f32 %v249, %v393
    %v396 = vmul.f32 %v249, %v394
    %v397 = vadd.f32 %v390, %v395
    %v398 = vadd.f32 %v391, %v396
    %s399 = scalar_lea.vmem %s3, %s46
    %v400 = vld [vmem:[%s399] sm:$0xff]
    %v401 = vld [vmem:[%s399 + $0x8] sm:$0xff]
    %v402 = vmul.f32 %v51, %v400
    %v403 = vmul.f32 %v51, %v401
    %s404 = scalar_lea.vmem %s3, %s55
    %v405 = vld [vmem:[%s404] sm:$0xff]
    %v406 = vld [vmem:[%s404 + $0x8] sm:$0xff]
    %v407 = vmul.f32 %v59, %v405
    %v408 = vmul.f32 %v59, %v406
    %v409 = vadd.f32 %v402, %v407
    %v410 = vadd.f32 %v403, %v408
    %s411 = scalar_lea.vmem %s3, %s65
    %v412 = vld [vmem:[%s411] sm:$0xff]
    %v413 = vld [vmem:[%s411 + $0x8] sm:$0xff]
    %v414 = vmul.f32 %v69, %v412
    %v415 = vmul.f32 %v69, %v413
    %v416 = vadd.f32 %v409, %v414
    %v417 = vadd.f32 %v410, %v415
    %s418 = scalar_lea.vmem %s3, %s75
    %v419 = vld [vmem:[%s418] sm:$0xff]
    %v420 = vld [vmem:[%s418 + $0x8] sm:$0xff]
    %v421 = vmul.f32 %v79, %v419
    %v422 = vmul.f32 %v79, %v420
    %v423 = vadd.f32 %v416, %v421
    %v424 = vadd.f32 %v417, %v422
    %s425 = scalar_lea.vmem %s3, %s85
    %v426 = vld [vmem:[%s425] sm:$0xff]
    %v427 = vld [vmem:[%s425 + $0x8] sm:$0xff]
    %v428 = vmul.f32 %v89, %v426
    %v429 = vmul.f32 %v89, %v427
    %v430 = vadd.f32 %v423, %v428
    %v431 = vadd.f32 %v424, %v429
    %s432 = scalar_lea.vmem %s3, %s95
    %v433 = vld [vmem:[%s432] sm:$0xff]
    %v434 = vld [vmem:[%s432 + $0x8] sm:$0xff]
    %v435 = vmul.f32 %v99, %v433
    %v436 = vmul.f32 %v99, %v434
    %v437 = vadd.f32 %v430, %v435
    %v438 = vadd.f32 %v431, %v436
    %s439 = scalar_lea.vmem %s3, %s105
    %v440 = vld [vmem:[%s439] sm:$0xff]
    %v441 = vld [vmem:[%s439 + $0x8] sm:$0xff]
    %v442 = vmul.f32 %v109, %v440
    %v443 = vmul.f32 %v109, %v441
    %v444 = vadd.f32 %v437, %v442
    %v445 = vadd.f32 %v438, %v443
    %s446 = scalar_lea.vmem %s3, %s115
    %v447 = vld [vmem:[%s446] sm:$0xff]
    %v448 = vld [vmem:[%s446 + $0x8] sm:$0xff]
    %v449 = vmul.f32 %v119, %v447
    %v450 = vmul.f32 %v119, %v448
    %v451 = vadd.f32 %v444, %v449
    %v452 = vadd.f32 %v445, %v450
    %s453 = scalar_lea.vmem %s3, %s125
    %v454 = vld [vmem:[%s453] sm:$0xff]
    %v455 = vld [vmem:[%s453 + $0x8] sm:$0xff]
    %v456 = vmul.f32 %v129, %v454
    %v457 = vmul.f32 %v129, %v455
    %v458 = vadd.f32 %v451, %v456
    %v459 = vadd.f32 %v452, %v457
    %s460 = scalar_lea.vmem %s3, %s135
    %v461 = vld [vmem:[%s460] sm:$0xff]
    %v462 = vld [vmem:[%s460 + $0x8] sm:$0xff]
    %v463 = vmul.f32 %v139, %v461
    %v464 = vmul.f32 %v139, %v462
    %v465 = vadd.f32 %v458, %v463
    %v466 = vadd.f32 %v459, %v464
    %s467 = scalar_lea.vmem %s3, %s145
    %v468 = vld [vmem:[%s467] sm:$0xff]
    %v469 = vld [vmem:[%s467 + $0x8] sm:$0xff]
    %v470 = vmul.f32 %v149, %v468
    %v471 = vmul.f32 %v149, %v469
    %v472 = vadd.f32 %v465, %v470
    %v473 = vadd.f32 %v466, %v471
    %s474 = scalar_lea.vmem %s3, %s155
    %v475 = vld [vmem:[%s474] sm:$0xff]
    %v476 = vld [vmem:[%s474 + $0x8] sm:$0xff]
    %v477 = vmul.f32 %v159, %v475
    %v478 = vmul.f32 %v159, %v476
    %v479 = vadd.f32 %v472, %v477
    %v480 = vadd.f32 %v473, %v478
    %s481 = scalar_lea.vmem %s3, %s165
    %v482 = vld [vmem:[%s481] sm:$0xff]
    %v483 = vld [vmem:[%s481 + $0x8] sm:$0xff]
    %v484 = vmul.f32 %v169, %v482
    %v485 = vmul.f32 %v169, %v483
    %v486 = vadd.f32 %v479, %v484
    %v487 = vadd.f32 %v480, %v485
    %s488 = scalar_lea.vmem %s3, %s175
    %v489 = vld [vmem:[%s488] sm:$0xff]
    %v490 = vld [vmem:[%s488 + $0x8] sm:$0xff]
    %v491 = vmul.f32 %v179, %v489
    %v492 = vmul.f32 %v179, %v490
    %v493 = vadd.f32 %v486, %v491
    %v494 = vadd.f32 %v487, %v492
    %s495 = scalar_lea.vmem %s3, %s185
    %v496 = vld [vmem:[%s495] sm:$0xff]
    %v497 = vld [vmem:[%s495 + $0x8] sm:$0xff]
    %v498 = vmul.f32 %v189, %v496
    %v499 = vmul.f32 %v189, %v497
    %v500 = vadd.f32 %v493, %v498
    %v501 = vadd.f32 %v494, %v499
    %s502 = scalar_lea.vmem %s3, %s195
    %v503 = vld [vmem:[%s502] sm:$0xff]
    %v504 = vld [vmem:[%s502 + $0x8] sm:$0xff]
    %v505 = vmul.f32 %v199, %v503
    %v506 = vmul.f32 %v199, %v504
    %v507 = vadd.f32 %v500, %v505
    %v508 = vadd.f32 %v501, %v506
    %s509 = scalar_lea.vmem %s3, %s205
    %v510 = vld [vmem:[%s509] sm:$0xff]
    %v511 = vld [vmem:[%s509 + $0x8] sm:$0xff]
    %v512 = vmul.f32 %v209, %v510
    %v513 = vmul.f32 %v209, %v511
    %v514 = vadd.f32 %v507, %v512
    %v515 = vadd.f32 %v508, %v513
    %s516 = scalar_lea.vmem %s3, %s215
    %v517 = vld [vmem:[%s516] sm:$0xff]
    %v518 = vld [vmem:[%s516 + $0x8] sm:$0xff]
    %v519 = vmul.f32 %v219, %v517
    %v520 = vmul.f32 %v219, %v518
    %v521 = vadd.f32 %v514, %v519
    %v522 = vadd.f32 %v515, %v520
    %s523 = scalar_lea.vmem %s3, %s225
    %v524 = vld [vmem:[%s523] sm:$0xff]
    %v525 = vld [vmem:[%s523 + $0x8] sm:$0xff]
    %v526 = vmul.f32 %v229, %v524
    %v527 = vmul.f32 %v229, %v525
    %v528 = vadd.f32 %v521, %v526
    %v529 = vadd.f32 %v522, %v527
    %s530 = scalar_lea.vmem %s3, %s235
    %v531 = vld [vmem:[%s530] sm:$0xff]
    %v532 = vld [vmem:[%s530 + $0x8] sm:$0xff]
    %v533 = vmul.f32 %v239, %v531
    %v534 = vmul.f32 %v239, %v532
    %v535 = vadd.f32 %v528, %v533
    %v536 = vadd.f32 %v529, %v534
    %s537 = scalar_lea.vmem %s3, %s245
    %v538 = vld [vmem:[%s537] sm:$0xff]
    %v539 = vld [vmem:[%s537 + $0x8] sm:$0xff]
    %v540 = vmul.f32 %v249, %v538
    %v541 = vmul.f32 %v249, %v539
    %v542 = vadd.f32 %v535, %v540
    %v543 = vadd.f32 %v536, %v541
    %v544 = vmul.f32 %v252, %v252
    %v545 = vmul.f32 %v253, %v253
    %v546 = vmul.f32 %v397, %v397
    %v547 = vmul.f32 %v398, %v398
    %v548 = vadd.f32 %v544, %v546
    %v549 = vadd.f32 %v545, %v547
    %v550 = vmul.f32 %v542, %v542
    %v551 = vmul.f32 %v543, %v543
    %v552 = vadd.f32 %v548, %v550
    %v553 = vadd.f32 %v549, %v551
    %v554 = vadd.f32 %v552, 1e-20
    %v555 = vadd.f32 %v553, 1e-20
    %v556 = vrsqrt.pop %v554
    %v557 = vrsqrt.pop %v555
    %v558 = vld [vmem:[%s4] sm:$0x1]
    %v560 = vlaneseq
    %v561 = vshrl.u32 %v560, 7
    %v562 = vsub.s32 0, %v561
    %v563 = vrot.slane %v558, %v562
    %567 = vrot.lane.b32.xlu0 %v556, 127
    %v568 = vpop.permute.xlu0 %567
    %569 = vrot.lane.b32.xlu0 %v557, 127
    %v570 = vpop.permute.xlu0 %569
    %v573 = vmul.f32 %v563, %v568
    %v574 = vmul.f32 %v563, %v570
    %v575 = vld [vmem:[%s5] sm:$0xf]
    %v576 = vld [vmem:[%s6] sm:$0x1]
    %579 = vrot.lane.b32.xlu0 %v573, 1
    %v580 = vpop.permute.xlu0 %579
    %581 = vrot.lane.b32.xlu0 %v574, 1
    %v582 = vpop.permute.xlu0 %581
    %v585 = vmul.f32 %v252, %v580
    %v586 = vmul.f32 %v253, %v582
    %588 = vset.pattern.permute.xlu0 0
    %589 = vperm.xlu0 %588, %v252
    %v590 = vpop.permute.xlu0 %589
    %593 = vset.pattern.permute.xlu0 0
    %594 = vperm.xlu0 %593, %v253
    %v595 = vpop.permute.xlu0 %594
    %v598 = vlaneseq
    %v599 = vshrl.u32 %v598, 7
    %v600 = vsub.s32 0, %v599
    %v601 = vrot.slane %v576, %v600
    %v603 = vmul.f32 %v590, %v601
    %v604 = vmul.f32 %v595, %v601
    %607 = vrot.lane.b32.xlu0 %v585, 127
    %v608 = vpop.permute.xlu0 %607
    %609 = vrot.lane.b32.xlu0 %v586, 127
    %v610 = vpop.permute.xlu0 %609
    %vm611 = vcmask 31744
    %v612 = vsel %vm611, %v608, 0
    %v614 = vsel %vm611, %v610, 0
    %vm616 = vcmask 1043456
    %v618 = vsel %vm616, %v575, 0
    %620 = vmatprep.subr.mxu0 0.0
    %621 = vmatpush1.msra.mxu0 %v618
    %622 = vmatprep.subr.mxu0 0.0
    %623 = vmatpush1.msra.mxu0 0.0
    %624 = vmatprep.subr.mxu0 0.0
    %625 = vmatpush1.msra.mxu0 0.0
    %626 = vmatprep.subr.mxu0 0.0
    %627 = vmatpush1.msra.mxu0 0.0
    %628 = vmatprep.subr.mxu0 0.0
    %629 = vmatpush1.msra.mxu0 0.0
    %630 = vmatprep.subr.mxu0 0.0
    %631 = vmatpush1.msra.mxu0 0.0
    %632 = vmatprep.subr.mxu0 0.0
    %633 = vmatpush1.msra.mxu0 0.0
    %634 = vmatprep.subr.mxu0 0.0
    %635 = vmatpush1.msra.mxu0 0.0
    %636 = vmatprep.subr.mxu0 0.0
    %637 = vmatpush1.msra.mxu0 0.0
    %638 = vmatprep.subr.mxu0 0.0
    %639 = vmatpush1.msra.mxu0 0.0
    %640 = vmatprep.subr.mxu0 0.0
    %641 = vmatpush1.msra.mxu0 0.0
    %642 = vmatprep.subr.mxu0 0.0
    %643 = vmatpush1.msra.mxu0 0.0
    %644 = vmatprep.subr.mxu0 0.0
    %645 = vmatpush1.msra.mxu0 0.0
    %646 = vmatprep.subr.mxu0 0.0
    %647 = vmatpush1.msra.mxu0 0.0
    %648 = vmatprep.subr.mxu0 0.0
    %649 = vmatpush1.msra.mxu0 0.0
    %650 = vmatprep.subr.mxu0 0.0
    %651 = vmatpush1.msra.mxu0 0.0
    %652 = vmatprep.subr.mxu0 0.0
    %653 = vmatpush1.msra.mxu0 0.0
    %654 = vmatprep.subr.mxu0 0.0
    %655 = vmatpush1.msra.mxu0 0.0
    %656 = vmatprep.subr.mxu0 0.0
    %657 = vmatpush1.msra.mxu0 0.0
    %658 = vmatprep.subr.mxu0 0.0
    %659 = vmatpush1.msra.mxu0 0.0
    %660 = vmatprep.subr.mxu0 0.0
    %661 = vmatpush1.msra.mxu0 0.0
    %662 = vmatprep.subr.mxu0 0.0
    %663 = vmatpush1.msra.mxu0 0.0
    %664 = vmatprep.subr.mxu0 0.0
    %665 = vmatpush1.msra.mxu0 0.0
    %666 = vmatprep.subr.mxu0 0.0
    %667 = vmatpush1.msra.mxu0 0.0
    %668 = vmatprep.subr.mxu0 0.0
    %669 = vmatpush1.msra.mxu0 0.0
    %670 = vmatprep.subr.mxu0 0.0
    %671 = vmatpush1.msra.mxu0 0.0
    %672 = vmatprep.subr.mxu0 0.0
    %673 = vmatpush1.msra.mxu0 0.0
    %674 = vmatprep.subr.mxu0 0.0
    %675 = vmatpush1.msra.mxu0 0.0
    %676 = vmatprep.subr.mxu0 0.0
    %677 = vmatpush1.msra.mxu0 0.0
    %678 = vmatprep.subr.mxu0 0.0
    %679 = vmatpush1.msra.mxu0 0.0
    %680 = vmatprep.subr.mxu0 0.0
    %681 = vmatpush1.msra.mxu0 0.0
    %682 = vmatprep.subr.mxu0 0.0
    %683 = vmatpush1.msra.mxu0 0.0
    %684 = vmatprep.mubr.f32.mxu0 0.0
    %685 = vmatmul.mubr.f32.gmra.mrb[0].mxu0 %v612
    %v686 = vpop.f32.mrb[0].mxu0
    %v687 = vadd.f32 0.0, %v686
    %v688 = vpop.f32.mrb[0].mxu0
    %689 = vmatprep.mubr.f32.mxu0 0.0
    %690 = vmatmul.mubr.f32.gmra.mrb[0].mxu0 %v614
    %v691 = vpop.f32.mrb[0].mxu0
    %v692 = vadd.f32 0.0, %v691
    %v693 = vpop.f32.mrb[0].mxu0
    %694 = vdwg.mxu0
    %v695 = vadd.f32 %v603, %v687
    %v696 = vadd.f32 %v604, %v692
    %697 = vst [vmem:[#allocation6] sm:$0xff] %v695
    %698 = vst [vmem:[#allocation6 + $0x8] sm:$0xff] %v696
    %vm701 = vcmask 1040384
    %v702 = vrot.slane %v695, 7
    %v703 = vrot.slane %v696, 7
    %v704 = vsel %vm701, %v702, %v703
    %v707 = vsub.f32 %v695, %v702
    %v708 = vsub.f32 %v696, %v704
    %v709 = vmul.f32 %v707, %v707
    %v710 = vmul.f32 %v708, %v708
    %vm713 = vcmask 1046528
    %v714 = vrot.slane %v709, 1
    %v715 = vrot.slane %v710, 1
    %v716 = vsel %vm713, %v714, %v715
    %v719 = vsel %vm713, %v715, 0.0
    %v720 = vadd.f32 %v716, %v719
    %721 = vadd.xlane.f32.xlu0 %v720
    %v722 = vpop.xlane.xlu0 %721
    %v723 = vrot.slane %v722, 4
    %v724 = vadd.f32 %v722, %v723
    %v725 = vrot.slane %v724, 2
    %v726 = vadd.f32 %v724, %v725
    %v727 = vrot.slane %v726, 1
    %v728 = vadd.f32 %v726, %v727
    %s729 = vtos %v728
    %v730 = vmul.f32 %v397, %v580
    %v731 = vmul.f32 %v398, %v582
    %733 = vset.pattern.permute.xlu0 0
    %734 = vperm.xlu0 %733, %v397
    %v735 = vpop.permute.xlu0 %734
    %738 = vset.pattern.permute.xlu0 0
    %739 = vperm.xlu0 %738, %v398
    %v740 = vpop.permute.xlu0 %739
    %v742 = vmul.f32 %v735, %v601
    %v743 = vmul.f32 %v740, %v601
    %746 = vrot.lane.b32.xlu0 %v730, 127
    %v747 = vpop.permute.xlu0 %746
    %748 = vrot.lane.b32.xlu0 %v731, 127
    %v749 = vpop.permute.xlu0 %748
    %v750 = vsel %vm611, %v747, 0
    %v752 = vsel %vm611, %v749, 0
    %754 = vmatprep.subr.mxu0 0.0
    %755 = vmatpush1.msra.mxu0 %v618
    %756 = vmatprep.subr.mxu0 0.0
    %757 = vmatpush1.msra.mxu0 0.0
    %758 = vmatprep.subr.mxu0 0.0
    %759 = vmatpush1.msra.mxu0 0.0
    %760 = vmatprep.subr.mxu0 0.0
    %761 = vmatpush1.msra.mxu0 0.0
    %762 = vmatprep.subr.mxu0 0.0
    %763 = vmatpush1.msra.mxu0 0.0
    %764 = vmatprep.subr.mxu0 0.0
    %765 = vmatpush1.msra.mxu0 0.0
    %766 = vmatprep.subr.mxu0 0.0
    %767 = vmatpush1.msra.mxu0 0.0
    %768 = vmatprep.subr.mxu0 0.0
    %769 = vmatpush1.msra.mxu0 0.0
    %770 = vmatprep.subr.mxu0 0.0
    %771 = vmatpush1.msra.mxu0 0.0
    %772 = vmatprep.subr.mxu0 0.0
    %773 = vmatpush1.msra.mxu0 0.0
    %774 = vmatprep.subr.mxu0 0.0
    %775 = vmatpush1.msra.mxu0 0.0
    %776 = vmatprep.subr.mxu0 0.0
    %777 = vmatpush1.msra.mxu0 0.0
    %778 = vmatprep.subr.mxu0 0.0
    %779 = vmatpush1.msra.mxu0 0.0
    %780 = vmatprep.subr.mxu0 0.0
    %781 = vmatpush1.msra.mxu0 0.0
    %782 = vmatprep.subr.mxu0 0.0
    %783 = vmatpush1.msra.mxu0 0.0
    %784 = vmatprep.subr.mxu0 0.0
    %785 = vmatpush1.msra.mxu0 0.0
    %786 = vmatprep.subr.mxu0 0.0
    %787 = vmatpush1.msra.mxu0 0.0
    %788 = vmatprep.subr.mxu0 0.0
    %789 = vmatpush1.msra.mxu0 0.0
    %790 = vmatprep.subr.mxu0 0.0
    %791 = vmatpush1.msra.mxu0 0.0
    %792 = vmatprep.subr.mxu0 0.0
    %793 = vmatpush1.msra.mxu0 0.0
    %794 = vmatprep.subr.mxu0 0.0
    %795 = vmatpush1.msra.mxu0 0.0
    %796 = vmatprep.subr.mxu0 0.0
    %797 = vmatpush1.msra.mxu0 0.0
    %798 = vmatprep.subr.mxu0 0.0
    %799 = vmatpush1.msra.mxu0 0.0
    %800 = vmatprep.subr.mxu0 0.0
    %801 = vmatpush1.msra.mxu0 0.0
    %802 = vmatprep.subr.mxu0 0.0
    %803 = vmatpush1.msra.mxu0 0.0
    %804 = vmatprep.subr.mxu0 0.0
    %805 = vmatpush1.msra.mxu0 0.0
    %806 = vmatprep.subr.mxu0 0.0
    %807 = vmatpush1.msra.mxu0 0.0
    %808 = vmatprep.subr.mxu0 0.0
    %809 = vmatpush1.msra.mxu0 0.0
    %810 = vmatprep.subr.mxu0 0.0
    %811 = vmatpush1.msra.mxu0 0.0
    %812 = vmatprep.subr.mxu0 0.0
    %813 = vmatpush1.msra.mxu0 0.0
    %814 = vmatprep.subr.mxu0 0.0
    %815 = vmatpush1.msra.mxu0 0.0
    %816 = vmatprep.subr.mxu0 0.0
    %817 = vmatpush1.msra.mxu0 0.0
    %818 = vmatprep.mubr.f32.mxu0 0.0
    %819 = vmatmul.mubr.f32.gmra.mrb[0].mxu0 %v750
    %v820 = vpop.f32.mrb[0].mxu0
    %v821 = vadd.f32 0.0, %v820
    %v822 = vpop.f32.mrb[0].mxu0
    %823 = vmatprep.mubr.f32.mxu0 0.0
    %824 = vmatmul.mubr.f32.gmra.mrb[0].mxu0 %v752
    %v825 = vpop.f32.mrb[0].mxu0
    %v826 = vadd.f32 0.0, %v825
    %v827 = vpop.f32.mrb[0].mxu0
    %828 = vdwg.mxu0
    %v829 = vadd.f32 %v742, %v821
    %v830 = vadd.f32 %v743, %v826
    %831 = vst [vmem:[#allocation7] sm:$0xff] %v829
    %832 = vst [vmem:[#allocation7 + $0x8] sm:$0xff] %v830
    %v835 = vrot.slane %v829, 7
    %v836 = vrot.slane %v830, 7
    %v837 = vsel %vm701, %v835, %v836
    %v840 = vsub.f32 %v829, %v835
    %v841 = vsub.f32 %v830, %v837
    %v842 = vmul.f32 %v840, %v840
    %v843 = vmul.f32 %v841, %v841
    %v846 = vrot.slane %v842, 1
    %v847 = vrot.slane %v843, 1
    %v848 = vsel %vm713, %v846, %v847
    %v851 = vsel %vm713, %v847, 0.0
    %v852 = vadd.f32 %v848, %v851
    %853 = vadd.xlane.f32.xlu0 %v852
    %v854 = vpop.xlane.xlu0 %853
    %v855 = vrot.slane %v854, 4
    %v856 = vadd.f32 %v854, %v855
    %v857 = vrot.slane %v856, 2
    %v858 = vadd.f32 %v856, %v857
    %v859 = vrot.slane %v858, 1
    %v860 = vadd.f32 %v858, %v859
    %s861 = vtos %v860
    %s862 = sadd.f32 %s729, %s861
    %v863 = vmul.f32 %v542, %v580
    %v864 = vmul.f32 %v543, %v582
    %866 = vset.pattern.permute.xlu0 0
    %867 = vperm.xlu0 %866, %v542
    %v868 = vpop.permute.xlu0 %867
    %871 = vset.pattern.permute.xlu0 0
    %872 = vperm.xlu0 %871, %v543
    %v873 = vpop.permute.xlu0 %872
    %v875 = vmul.f32 %v868, %v601
    %v876 = vmul.f32 %v873, %v601
    %879 = vrot.lane.b32.xlu0 %v863, 127
    %v880 = vpop.permute.xlu0 %879
    %881 = vrot.lane.b32.xlu0 %v864, 127
    %v882 = vpop.permute.xlu0 %881
    %v883 = vsel %vm611, %v880, 0
    %v885 = vsel %vm611, %v882, 0
    %887 = vmatprep.subr.mxu0 0.0
    %888 = vmatpush1.msra.mxu0 %v618
    %889 = vmatprep.subr.mxu0 0.0
    %890 = vmatpush1.msra.mxu0 0.0
    %891 = vmatprep.subr.mxu0 0.0
    %892 = vmatpush1.msra.mxu0 0.0
    %893 = vmatprep.subr.mxu0 0.0
    %894 = vmatpush1.msra.mxu0 0.0
    %895 = vmatprep.subr.mxu0 0.0
    %896 = vmatpush1.msra.mxu0 0.0
    %897 = vmatprep.subr.mxu0 0.0
    %898 = vmatpush1.msra.mxu0 0.0
    %899 = vmatprep.subr.mxu0 0.0
    %900 = vmatpush1.msra.mxu0 0.0
    %901 = vmatprep.subr.mxu0 0.0
    %902 = vmatpush1.msra.mxu0 0.0
    %903 = vmatprep.subr.mxu0 0.0
    %904 = vmatpush1.msra.mxu0 0.0
    %905 = vmatprep.subr.mxu0 0.0
    %906 = vmatpush1.msra.mxu0 0.0
    %907 = vmatprep.subr.mxu0 0.0
    %908 = vmatpush1.msra.mxu0 0.0
    %909 = vmatprep.subr.mxu0 0.0
    %910 = vmatpush1.msra.mxu0 0.0
    %911 = vmatprep.subr.mxu0 0.0
    %912 = vmatpush1.msra.mxu0 0.0
    %913 = vmatprep.subr.mxu0 0.0
    %914 = vmatpush1.msra.mxu0 0.0
    %915 = vmatprep.subr.mxu0 0.0
    %916 = vmatpush1.msra.mxu0 0.0
    %917 = vmatprep.subr.mxu0 0.0
    %918 = vmatpush1.msra.mxu0 0.0
    %919 = vmatprep.subr.mxu0 0.0
    %920 = vmatpush1.msra.mxu0 0.0
    %921 = vmatprep.subr.mxu0 0.0
    %922 = vmatpush1.msra.mxu0 0.0
    %923 = vmatprep.subr.mxu0 0.0
    %924 = vmatpush1.msra.mxu0 0.0
    %925 = vmatprep.subr.mxu0 0.0
    %926 = vmatpush1.msra.mxu0 0.0
    %927 = vmatprep.subr.mxu0 0.0
    %928 = vmatpush1.msra.mxu0 0.0
    %929 = vmatprep.subr.mxu0 0.0
    %930 = vmatpush1.msra.mxu0 0.0
    %931 = vmatprep.subr.mxu0 0.0
    %932 = vmatpush1.msra.mxu0 0.0
    %933 = vmatprep.subr.mxu0 0.0
    %934 = vmatpush1.msra.mxu0 0.0
    %935 = vmatprep.subr.mxu0 0.0
    %936 = vmatpush1.msra.mxu0 0.0
    %937 = vmatprep.subr.mxu0 0.0
    %938 = vmatpush1.msra.mxu0 0.0
    %939 = vmatprep.subr.mxu0 0.0
    %940 = vmatpush1.msra.mxu0 0.0
    %941 = vmatprep.subr.mxu0 0.0
    %942 = vmatpush1.msra.mxu0 0.0
    %943 = vmatprep.subr.mxu0 0.0
    %944 = vmatpush1.msra.mxu0 0.0
    %945 = vmatprep.subr.mxu0 0.0
    %946 = vmatpush1.msra.mxu0 0.0
    %947 = vmatprep.subr.mxu0 0.0
    %948 = vmatpush1.msra.mxu0 0.0
    %949 = vmatprep.subr.mxu0 0.0
    %950 = vmatpush1.msra.mxu0 0.0
    %951 = vmatprep.mubr.f32.mxu0 0.0
    %952 = vmatmul.mubr.f32.gmra.mrb[0].mxu0 %v883
    %v953 = vpop.f32.mrb[0].mxu0
    %v954 = vadd.f32 0.0, %v953
    %v955 = vpop.f32.mrb[0].mxu0
    %956 = vmatprep.mubr.f32.mxu0 0.0
    %957 = vmatmul.mubr.f32.gmra.mrb[0].mxu0 %v885
    %v958 = vpop.f32.mrb[0].mxu0
    %v959 = vadd.f32 0.0, %v958
    %v960 = vpop.f32.mrb[0].mxu0
    %961 = vdwg.mxu0
    %v962 = vadd.f32 %v875, %v954
    %v963 = vadd.f32 %v876, %v959
    %964 = vst [vmem:[#allocation9] sm:$0xff] %v962
    %965 = vst [vmem:[#allocation9 + $0x8] sm:$0xff] %v963
    %v968 = vrot.slane %v962, 7
    %v969 = vrot.slane %v963, 7
    %v970 = vsel %vm701, %v968, %v969
    %v973 = vsub.f32 %v962, %v968
    %v974 = vsub.f32 %v963, %v970
    %v975 = vmul.f32 %v973, %v973
    %v976 = vmul.f32 %v974, %v974
    %v979 = vrot.slane %v975, 1
    %v980 = vrot.slane %v976, 1
    %v981 = vsel %vm713, %v979, %v980
    %v984 = vsel %vm713, %v980, 0.0
    %v985 = vadd.f32 %v981, %v984
    %986 = vadd.xlane.f32.xlu0 %v985
    %v987 = vpop.xlane.xlu0 %986
    %v988 = vrot.slane %v987, 4
    %v989 = vadd.f32 %v987, %v988
    %v990 = vrot.slane %v989, 2
    %v991 = vadd.f32 %v989, %v990
    %v992 = vrot.slane %v991, 1
    %v993 = vadd.f32 %v991, %v992
    %s994 = vtos %v993
    %s995 = sadd.f32 %s862, %s994
    %s996 = scalar_lea.smem [#allocation10], 0
    %997 = sst [smem:[%s996]] %s995
    // Predicated region
    $region34: #{tpu_custom_call.1} parent=1 // pred_check
      _
    $region35: #{tpu_custom_call.1} parent=1 // pred_check_branch
      %999 = sbr.rel (0) target = $region37
    $region36: #{tpu_custom_call.1} parent=1 // pred_region
      %s1001 = ssub.s32 256, 256
      %1002 = vsyncadd [#allocation3], %s1001
      %s1003 = sshll.u32 [#allocation6], 4
      %s1004 = int_to_ptr.vmem [resolvable:$true] %s1003
      %1009 = dma.vmem_to_hbm [thread:$0]  %s1004, 256, %s7, [#allocation3], 128, 128, 8
    $region37: #{tpu_custom_call.1} parent=1 // pred_fallthru
      _
    // Predicated region
    $region38: #{tpu_custom_call.1} parent=1 // pred_check
      _
    $region39: #{tpu_custom_call.1} parent=1 // pred_check_branch
      %1011 = sbr.rel (0) target = $region41
    $region40: #{tpu_custom_call.1} parent=1 // pred_region
      %s1013 = ssub.s32 256, 256
      %1014 = vsyncadd [#allocation8], %s1013
      %s1015 = sshll.u32 [#allocation7], 4
      %s1016 = int_to_ptr.vmem [resolvable:$true] %s1015
      %1021 = dma.vmem_to_hbm [thread:$0]  %s1016, 256, %s8, [#allocation8], 128, 128, 8
    $region41: #{tpu_custom_call.1} parent=1 // pred_fallthru
      _
    // Predicated region
    $region42: #{tpu_custom_call.1} parent=1 // pred_check
      _
    $region43: #{tpu_custom_call.1} parent=1 // pred_check_branch
      %1023 = sbr.rel (0) target = $region45
    $region44: #{tpu_custom_call.1} parent=1 // pred_region
      %s1025 = ssub.s32 256, 256
      %1026 = vsyncadd [#allocation8], %s1025
      %s1027 = sshll.u32 [#allocation9], 4
      %s1028 = int_to_ptr.vmem [resolvable:$true] %s1027
      %1033 = dma.vmem_to_hbm [thread:$0]  %s1028, 256, %s9, [#allocation8], 128, 128, 8
    $region45: #{tpu_custom_call.1} parent=1 // pred_fallthru
      _
    // Predicated region
    $region46: #{tpu_custom_call.1} parent=1 // pred_check
      _
    $region47: #{tpu_custom_call.1} parent=1 // pred_check_branch
      %1035 = sbr.rel (0) target = $region49
    $region48: #{tpu_custom_call.1} parent=1 // pred_region
      %s1037 = ssub.s32 16, 16
      %1038 = vsyncadd [#allocation4], %s1037
      %1041 = dma.smem_to_hbm [#allocation10], 16, %s10, [#allocation4]
    $region49: #{tpu_custom_call.1} parent=1 // pred_fallthru
      _
    // Predicated region
    $region50: #{tpu_custom_call.1} parent=1 // pred_check
      _
    $region51: #{tpu_custom_call.1} parent=1 // pred_check_branch
      %1043 = sbr.rel (0) target = $region53
    $region52: #{tpu_custom_call.1} parent=1 // pred_region
      %1044 = dma.done [#allocation3], 256
    $region53: #{tpu_custom_call.1} parent=1 // pred_fallthru
      _
    // Predicated region
    $region54: #{tpu_custom_call.1} parent=1 // pred_check
      _
    $region55: #{tpu_custom_call.1} parent=1 // pred_check_branch
      %1046 = sbr.rel (0) target = $region57
    $region56: #{tpu_custom_call.1} parent=1 // pred_region
      %1047 = dma.done [#allocation8], 256
    $region57: #{tpu_custom_call.1} parent=1 // pred_fallthru
      _
    // Predicated region
    $region58: #{tpu_custom_call.1} parent=1 // pred_check
      _
    $region59: #{tpu_custom_call.1} parent=1 // pred_check_branch
      %1049 = sbr.rel (0) target = $region61
    $region60: #{tpu_custom_call.1} parent=1 // pred_region
      %1050 = dma.done [#allocation8], 256
    $region61: #{tpu_custom_call.1} parent=1 // pred_fallthru
      _
    // Predicated region
    $region62: #{tpu_custom_call.1} parent=1 // pred_check
      _
    $region63: #{tpu_custom_call.1} parent=1 // pred_check_branch
      %1052 = sbr.rel (0) target = $region65
    $region64: #{tpu_custom_call.1} parent=1 // pred_region
      %1053 = dma.done [#allocation4], 16
    $region65: #{tpu_custom_call.1} parent=1 // pred_fallthru
      _
    %1054 = sfence
    %1055 = vsyncpa [#allocation3], 1
    %1056 = vsyncpa [#allocation8], 1
    %1057 = vsyncpa [#allocation4], 1
    %1058 = vsyncpa [#allocation5], 1

</llo_original>
